<compile_context>
chip_gen: v7x
topology: tpu7x:2x2x1
jax: 0.10.0
libtpu: 0.0.40
codegen_flags: <defaults>
</compile_context>

<pallas_src>
import functools

import jax
import jax.numpy as jnp
from jax.experimental import pallas as pl
from jax.experimental.pallas import tpu as pltpu


def _ev_tgn_kernel(tgt_ref, prev_ref, cur_ref, tri_ref, adj_ref, *,
                   radius_px, delta_t_us, max_neighbors, max_queue_size,
                   tm, prev_w):
    """One row-block of the banded, capped adjacency.

    tgt_ref  : (TM, 4) int32   — target rows [x, y, t, batch] for events [i0, i0+TM)
    prev_ref : (4, PREV) int32 — source columns [i0-PREV, i0)     (clamped at block 0)
    cur_ref  : (4, TM) int32   — source columns [i0, i0+TM)
    tri_ref  : (BAND, BAND) bf16 upper-tri ones (tri[k, j] = k <= j), constant block
    adj_ref  : (TM, BAND) int8 — banded adjacency, band column c -> abs col i0-PREV+c
    """
    band = prev_w + tm
    g = pl.program_id(0)
    i0 = g * tm

    tgt = tgt_ref[...]                                            # (TM, 4) int32
    xi, yi, ti, bi = tgt[:, 0:1], tgt[:, 1:2], tgt[:, 2:3], tgt[:, 3:4]

    src = jnp.concatenate([prev_ref[...], cur_ref[...]], axis=1)  # (4, BAND) int32
    xj, yj, tj, bj = src[0:1, :], src[1:2, :], src[2:3, :], src[3:4, :]

    row_ids = i0 + jax.lax.broadcasted_iota(jnp.int32, (tm, band), 0)
    # Absolute source index implied by each band column (negative for the clamped
    # prev-window of the first grid step -> masked out below).
    col_ids = (i0 - prev_w) + jax.lax.broadcasted_iota(jnp.int32, (tm, band), 1)

    dx = xi - xj
    dy = yi - yj
    dt = ti - tj

    mask = col_ids < row_ids                                      # only past events
    mask &= (row_ids - col_ids) <= max_queue_size                 # sliding queue
    mask &= col_ids >= 0                                          # kills clamped prev @ g==0
    mask &= bi == bj                                              # same graph in batch
    mask &= jnp.abs(dx) <= radius_px
    mask &= jnp.abs(dy) <= radius_px
    mask &= dt >= 0
    mask &= dt <= delta_t_us
    # NOTE: this wrapper assumes N == real event count (already padded to a multiple
    # of 128 with real events). If callers pad with dummy events, their `batch` ids
    # must be a sentinel so bi == bj cannot match padding.

    # Cap to max_neighbors earliest sources per target: inclusive prefix count via a
    # bf16 upper-tri MXU matmul (exact: 0/1 operands, f32 accumulation, counts <= BAND).
    cnt = jnp.dot(mask.astype(jnp.bfloat16), tri_ref[...],
                  preferred_element_type=jnp.float32)             # (TM, BAND) f32
    capped = jnp.logical_and(mask, cnt <= max_neighbors)

    adj_ref[...] = capped.astype(jnp.int8)


def ev_tgn_forward(pos, batch, *, width, height, time_window,
                   radius=0.05, max_neighbors=16, max_queue_size=128, tm=128):
    """Returns (edge_index [2, N*max_neighbors] int32, -1 padded; pos_denorm [N,3] int32;
    banded adjacency [N, BAND] int8)."""
    n = pos.shape[0]
    prev_w = ((max_queue_size + 127) // 128) * 128    # band of past columns, lane-aligned
    band = prev_w + tm
    assert tm % 128 == 0 and tm % prev_w == 0, "tm must be a multiple of the prev window"
    assert n % tm == 0, "pad event count to a multiple of tm for this demo"

    # matches EV_TGN.init_graph_creator
    radius_px = int(radius * width + 1)
    delta_t_us = int(radius * time_window)

    # ---- denormalize + pack (x, y, t, batch) once in XLA (trivial N*4 elementwise) ----
    denorm = jnp.array([width, height, time_window], jnp.float32)
    pos_denorm = (denorm[None, :] * pos.astype(jnp.float32) + 0.001).astype(jnp.int32)
    feat_rows = jnp.concatenate(
        [pos_denorm, batch.astype(jnp.int32).reshape(n, 1)], axis=1)     # (N, 4) int32
    feat_cols = feat_rows.T                                              # (4, N) int32

    # Upper-triangular ones for the prefix-count matmul, loaded into VMEM once
    # (constant index_map -> Pallas skips the re-DMA on every later grid step).
    kk = jnp.arange(band, dtype=jnp.int32)
    tri = (kk[:, None] <= kk[None, :]).astype(jnp.bfloat16)              # (BAND, BAND)

    kernel = functools.partial(
        _ev_tgn_kernel,
        radius_px=radius_px, delta_t_us=delta_t_us,
        max_neighbors=max_neighbors, max_queue_size=max_queue_size,
        tm=tm, prev_w=prev_w)

    blocks_per_tile = tm // prev_w
    adj_band = pl.pallas_call(
        kernel,
        out_shape=jax.ShapeDtypeStruct((n, band), jnp.int8),
        grid_spec=pltpu.PrefetchScalarGridSpec(
            num_scalar_prefetch=0,
            grid=(n // tm,),
            in_specs=[
                # target rows [i0, i0+TM): (x, y, t, batch)
                pl.BlockSpec((tm, 4), lambda g: (g, 0)),
                # past source columns [i0 - prev_w, i0), clamped to block 0 at g == 0
                # (those columns are masked out via col_ids >= 0 in the kernel)
                pl.BlockSpec((4, prev_w),
                             lambda g: (0, jnp.maximum(g * blocks_per_tile - 1, 0))),
                # current source columns [i0, i0+TM)
                pl.BlockSpec((4, tm), lambda g: (0, g)),
                # constant upper-tri block
                pl.BlockSpec((band, band), lambda g: (0, 0)),
            ],
            out_specs=pl.BlockSpec((tm, band), lambda g: (g, 0)),
        ),
        compiler_params=pltpu.CompilerParams(
            dimension_semantics=("parallel",)),
    )(feat_rows, feat_cols, feat_cols, tri)

    # ---- plain-JAX glue: compact the band into an edge list (fixed size, -1 padded) ----
    max_edges = n * max_neighbors
    dst, rel = jnp.nonzero(adj_band, size=max_edges, fill_value=-1)
    src = (dst // tm) * tm - prev_w + rel          # band column -> absolute source index
    valid = dst >= 0
    edge_index = jnp.stack([jnp.where(valid, src, -1),
                            jnp.where(valid, dst, -1)]).astype(jnp.int32)
    return edge_index, pos_denorm, adj_band


# ---------------------------------------------------------------------------
# Pure-JAX reference + verification helpers
# ---------------------------------------------------------------------------
def _reference_adj(pos, batch, *, width, height, time_window,
                   radius, max_neighbors, max_queue_size):
    """Full (N, N) capped adjacency reference."""
    n = pos.shape[0]
    radius_px = int(radius * width + 1)
    delta_t_us = int(radius * time_window)
    denorm = jnp.array([width, height, time_window], jnp.float32)
    pd = (denorm[None, :] * pos.astype(jnp.float32) + 0.001).astype(jnp.int32)
    xi, yi, ti = pd[:, 0:1], pd[:, 1:2], pd[:, 2:3]
    xj, yj, tj = pd[:, 0][None], pd[:, 1][None], pd[:, 2][None]
    ids = jnp.arange(n, dtype=jnp.int32)
    row_ids, col_ids = ids[:, None], ids[None, :]
    bi, bj = batch.astype(jnp.int32)[:, None], batch.astype(jnp.int32)[None, :]
    dt = ti - tj
    mask = ((col_ids < row_ids) & ((row_ids - col_ids) <= max_queue_size) & (bi == bj)
            & (jnp.abs(xi - xj) <= radius_px) & (jnp.abs(yi - yj) <= radius_px)
            & (dt >= 0) & (dt <= delta_t_us))
    cnt = jnp.cumsum(mask.astype(jnp.int32), axis=-1)
    return (mask & (cnt <= max_neighbors)).astype(jnp.int32), pd


def _band_to_full(adj_band, tm, prev_w, n):
    """Scatter the (N, BAND) banded adjacency back into a full (N, N) matrix."""
    band = adj_band.shape[1]
    rows = jnp.arange(n, dtype=jnp.int32)[:, None]
    cols = (rows // tm) * tm - prev_w + jnp.arange(band, dtype=jnp.int32)[None, :]
    valid = (cols >= 0) & (cols < n)
    vals = jnp.where(valid, adj_band.astype(jnp.int32), 0)
    full = jnp.zeros((n, n), jnp.int32)
    return full.at[rows, jnp.clip(cols, 0, n - 1)].add(vals)


if __name__ == "__main__":
    # Small, deterministic event batch: 2 graphs x 128 events = 256 events.
    key = jax.random.PRNGKey(0)
    N, B = 256, 2
    width, height, time_window = 64, 64, 1_000_000
    radius, max_neighbors, max_queue_size = 0.05, 16, 128
    TM, PREV = 128, 128

    kx, ky, kt = jax.random.split(key, 3)
    x = jax.random.uniform(kx, (N, 1), jnp.float32)
    y = jax.random.uniform(ky, (N, 1), jnp.float32)
    # times sorted within each graph (sliding-window assumption)
    t = jnp.sort(jax.random.uniform(kt, (B, N // B), jnp.float32), axis=1).reshape(N, 1)
    pos = jnp.concatenate([x, y, t], axis=1)                    # (N, 3) normalized [0, 1]
    batch = jnp.repeat(jnp.arange(B, dtype=jnp.int32), N // B)  # (N,)

    edge_index, pos_denorm, adj_band = ev_tgn_forward(
        pos, batch, width=width, height=height, time_window=time_window,
        radius=radius, max_neighbors=max_neighbors, max_queue_size=max_queue_size, tm=TM)
    jax.block_until_ready((edge_index, pos_denorm, adj_band))

    ref_adj, ref_pd = _reference_adj(
        pos, batch, width=width, height=height, time_window=time_window,
        radius=radius, max_neighbors=max_neighbors, max_queue_size=max_queue_size)

    # 1) denormalization matches
    assert jnp.array_equal(pos_denorm, ref_pd), "denormalize_pos mismatch"
    # 2) banded adjacency == full reference adjacency
    full_from_band = _band_to_full(adj_band, TM, PREV, N)
    assert jnp.array_equal(full_from_band, ref_adj), "adjacency mismatch"
    # 3) edge-list compaction consistent with the reference adjacency
    valid = edge_index[1] >= 0
    d = edge_index[1][valid]
    s = edge_index[0][valid]
    assert int(valid.sum()) == int(ref_adj.sum()), "edge count mismatch"
    assert bool(jnp.all(ref_adj[d, s] == 1)), "edge coordinates mismatch"

    print("KERNEL_OK")
</pallas_src>

<mosaic_0001>
module attributes {stable_mosaic.version = 11 : i64} {
  func.func @_ev_tgn_kernel(%arg0: i32, %arg1: memref<128x4xi32, #tpu.memory_space<vmem>>, %arg2: memref<4x128xi32, #tpu.memory_space<vmem>>, %arg3: memref<4x128xi32, #tpu.memory_space<vmem>>, %arg4: memref<256x256xbf16, #tpu.memory_space<vmem>>, %arg5: memref<128x256xi8, #tpu.memory_space<vmem>>) attributes {dimension_semantics = [#tpu.dimension_semantics<parallel>], iteration_bounds = array<i64: 2>, scalar_prefetch = 0 : i64, scratch_operands = 0 : i64, tpu.core_type = #tpu.core_type<tc>, window_params = [{transform_indices = @transform_0, window_bounds = array<i64: 128, 4>}, {transform_indices = @transform_1, window_bounds = array<i64: 4, 128>}, {transform_indices = @transform_2, window_bounds = array<i64: 4, 128>}, {pipeline_mode = #tpu.pipeline_mode<synchronous>, transform_indices = @transform_3, window_bounds = array<i64: 256, 256>}, {transform_indices = @transform_4, window_bounds = array<i64: 128, 256>}]} {
    %c128_i32 = arith.constant 128 : i32
    %0 = arith.muli %arg0, %c128_i32 : i32
    %c0 = arith.constant 0 : index
    %c0_0 = arith.constant 0 : index
    %1 = vector.load %arg1[%c0, %c0_0] : memref<128x4xi32, #tpu.memory_space<vmem>>, vector<128x4xi32>
    %2 = vector.extract_strided_slice %1 {offsets = [0, 0], sizes = [128, 1], strides = [1, 1]} : vector<128x4xi32> to vector<128x1xi32>
    %3 = vector.extract_strided_slice %1 {offsets = [0, 1], sizes = [128, 1], strides = [1, 1]} : vector<128x4xi32> to vector<128x1xi32>
    %4 = vector.extract_strided_slice %1 {offsets = [0, 2], sizes = [128, 1], strides = [1, 1]} : vector<128x4xi32> to vector<128x1xi32>
    %5 = vector.extract_strided_slice %1 {offsets = [0, 3], sizes = [128, 1], strides = [1, 1]} : vector<128x4xi32> to vector<128x1xi32>
    %c0_1 = arith.constant 0 : index
    %c0_2 = arith.constant 0 : index
    %6 = vector.load %arg2[%c0_1, %c0_2] : memref<4x128xi32, #tpu.memory_space<vmem>>, vector<4x128xi32>
    %c0_3 = arith.constant 0 : index
    %c0_4 = arith.constant 0 : index
    %7 = vector.load %arg3[%c0_3, %c0_4] : memref<4x128xi32, #tpu.memory_space<vmem>>, vector<4x128xi32>
    %8 = tpu.concatenate %6, %7 in 1 : vector<4x128xi32>, vector<4x128xi32> -> vector<4x256xi32>
    %9 = vector.extract_strided_slice %8 {offsets = [0, 0], sizes = [1, 256], strides = [1, 1]} : vector<4x256xi32> to vector<1x256xi32>
    %10 = vector.extract_strided_slice %8 {offsets = [1, 0], sizes = [1, 256], strides = [1, 1]} : vector<4x256xi32> to vector<1x256xi32>
    %11 = vector.extract_strided_slice %8 {offsets = [2, 0], sizes = [1, 256], strides = [1, 1]} : vector<4x256xi32> to vector<1x256xi32>
    %12 = vector.extract_strided_slice %8 {offsets = [3, 0], sizes = [1, 256], strides = [1, 1]} : vector<4x256xi32> to vector<1x256xi32>
    %13 = tpu.iota {dimensions = array<i32: 0>} : vector<128x256xi32>
    %14 = vector.broadcast %0 : i32 to vector<128x256xi32>
    %15 = arith.addi %14, %13 : vector<128x256xi32>
    %c128_i32_5 = arith.constant 128 : i32
    %16 = arith.subi %0, %c128_i32_5 : i32
    %17 = tpu.iota {dimensions = array<i32: 1>} : vector<128x256xi32>
    %18 = vector.broadcast %16 : i32 to vector<128x256xi32>
    %19 = arith.addi %18, %17 : vector<128x256xi32>
    %20 = vector.broadcast %2 : vector<128x1xi32> to vector<128x256xi32>
    %21 = vector.broadcast %9 : vector<1x256xi32> to vector<128x256xi32>
    %22 = arith.subi %20, %21 : vector<128x256xi32>
    %23 = vector.broadcast %3 : vector<128x1xi32> to vector<128x256xi32>
    %24 = vector.broadcast %10 : vector<1x256xi32> to vector<128x256xi32>
    %25 = arith.subi %23, %24 : vector<128x256xi32>
    %26 = vector.broadcast %4 : vector<128x1xi32> to vector<128x256xi32>
    %27 = vector.broadcast %11 : vector<1x256xi32> to vector<128x256xi32>
    %28 = arith.subi %26, %27 : vector<128x256xi32>
    %29 = arith.cmpi slt, %19, %15 : vector<128x256xi32>
    %30 = arith.subi %15, %19 : vector<128x256xi32>
    %c128_i32_6 = arith.constant 128 : i32
    %31 = vector.broadcast %c128_i32_6 : i32 to vector<128x256xi32>
    %32 = arith.cmpi sle, %30, %31 : vector<128x256xi32>
    %33 = arith.andi %29, %32 : vector<128x256xi1>
    %c0_i32 = arith.constant 0 : i32
    %34 = vector.broadcast %c0_i32 : i32 to vector<128x256xi32>
    %35 = arith.cmpi sge, %19, %34 : vector<128x256xi32>
    %36 = arith.andi %33, %35 : vector<128x256xi1>
    %37 = vector.broadcast %5 : vector<128x1xi32> to vector<128x256xi32>
    %38 = vector.broadcast %12 : vector<1x256xi32> to vector<128x256xi32>
    %39 = arith.cmpi eq, %37, %38 : vector<128x256xi32>
    %40 = arith.andi %36, %39 : vector<128x256xi1>
    %41 = math.absi %22 : vector<128x256xi32>
    %c4_i32 = arith.constant 4 : i32
    %42 = vector.broadcast %c4_i32 : i32 to vector<128x256xi32>
    %43 = arith.cmpi sle, %41, %42 : vector<128x256xi32>
    %44 = arith.andi %40, %43 : vector<128x256xi1>
    %45 = math.absi %25 : vector<128x256xi32>
    %c4_i32_7 = arith.constant 4 : i32
    %46 = vector.broadcast %c4_i32_7 : i32 to vector<128x256xi32>
    %47 = arith.cmpi sle, %45, %46 : vector<128x256xi32>
    %48 = arith.andi %44, %47 : vector<128x256xi1>
    %c0_i32_8 = arith.constant 0 : i32
    %49 = vector.broadcast %c0_i32_8 : i32 to vector<128x256xi32>
    %50 = arith.cmpi sge, %28, %49 : vector<128x256xi32>
    %51 = arith.andi %48, %50 : vector<128x256xi1>
    %c50000_i32 = arith.constant 50000 : i32
    %52 = vector.broadcast %c50000_i32 : i32 to vector<128x256xi32>
    %53 = arith.cmpi sle, %28, %52 : vector<128x256xi32>
    %54 = arith.andi %51, %53 : vector<128x256xi1>
    %55 = arith.extui %54 : vector<128x256xi1> to vector<128x256xi32>
    %56 = arith.sitofp %55 : vector<128x256xi32> to vector<128x256xf32>
    %57 = arith.truncf %56 : vector<128x256xf32> to vector<128x256xbf16>
    %c0_9 = arith.constant 0 : index
    %c0_10 = arith.constant 0 : index
    %58 = vector.load %arg4[%c0_9, %c0_10] : memref<256x256xbf16, #tpu.memory_space<vmem>>, vector<256x256xbf16>
    %cst = arith.constant dense<0.000000e+00> : vector<128x256xf32>
    %59 = tpu.matmul %57, %58, %cst {dimension_numbers = #tpu.dot_dimension_numbers<[1], [0], [0], [1], [0, 0, 1, 1], [], []>} : vector<128x256xbf16>, vector<256x256xbf16>, vector<128x256xf32> -> vector<128x256xf32>
    %cst_11 = arith.constant 1.600000e+01 : f32
    %60 = vector.broadcast %cst_11 : f32 to vector<128x256xf32>
    %61 = arith.cmpf ole, %59, %60 : vector<128x256xf32>
    %62 = arith.andi %54, %61 : vector<128x256xi1>
    %63 = arith.extui %62 : vector<128x256xi1> to vector<128x256xi8>
    %c0_12 = arith.constant 0 : index
    %c0_13 = arith.constant 0 : index
    %64 = vector.load %arg5[%c0_12, %c0_13] : memref<128x256xi8, #tpu.memory_space<vmem>>, vector<128x256xi8>
    tpu.vector_store %arg5[%c0_12, %c0_13], %63 {strides = array<i32>} : memref<128x256xi8, #tpu.memory_space<vmem>>, vector<128x256xi8>,
    return
  }
  func.func @transform_0(%arg0: i32) -> (i32, i32) {
    %c0_i32 = arith.constant 0 : i32
    %c0_i32_0 = arith.constant 0 : i32
    return %arg0, %c0_i32 : i32, i32
  }
  func.func @transform_1(%arg0: i32) -> (i32, i32) {
    %c1_i32 = arith.constant 1 : i32
    %0 = arith.muli %arg0, %c1_i32 : i32
    %c1_i32_0 = arith.constant 1 : i32
    %1 = arith.subi %0, %c1_i32_0 : i32
    %c0_i32 = arith.constant 0 : i32
    %2 = arith.maxsi %1, %c0_i32 : i32
    %c0_i32_1 = arith.constant 0 : i32
    %c0_i32_2 = arith.constant 0 : i32
    return %c0_i32_1, %2 : i32, i32
  }
  func.func @transform_2(%arg0: i32) -> (i32, i32) {
    %c0_i32 = arith.constant 0 : i32
    %c0_i32_0 = arith.constant 0 : i32
    return %c0_i32, %arg0 : i32, i32
  }
  func.func @transform_3(%arg0: i32) -> (i32, i32) {
    %c0_i32 = arith.constant 0 : i32
    %c0_i32_0 = arith.constant 0 : i32
    %c0_i32_1 = arith.constant 0 : i32
    return %c0_i32, %c0_i32_0 : i32, i32
  }
  func.func @transform_4(%arg0: i32) -> (i32, i32) {
    %c0_i32 = arith.constant 0 : i32
    %c0_i32_0 = arith.constant 0 : i32
    return %arg0, %c0_i32 : i32, i32
  }
}

</mosaic_0001>

<llo_original>
// kernel: tpu_custom_call.1
$region0: #{tpu_custom_call.1}
  #allocation0 [shape = 'u32[]', space=smem, size = 0x4, offset = 0x4, fixed_abs, tag = 'smem constant byte address 0x4 - core index']
  #allocation1 [shape = 'u32[144,128]{1,0:T(1,128)}', space=vmem, size = 0x12000, scoped, tag = 'internal scratch']
  %s0 = inlined_call_operand.vmem [shape: s32[256,4], index: 0, kind: input, shape index: {}]
  %s1 = inlined_call_operand.vmem [shape: s32[4,256], index: 1, kind: input, shape index: {}]
  %s2 = inlined_call_operand.vmem [shape: s32[4,256], index: 2, kind: input, shape index: {}]
  %s3 = inlined_call_operand.vmem [shape: bf16[256,256], index: 3, kind: input, shape index: {}]
  %s4 = inlined_call_operand.hbm [shape: s8[256,256], index: 4, kind: output, shape index: {}]
  %s5 = sld [smem:[#allocation0]]
  $region49: #{tpu_custom_call.1} parent=0
    _
  %s7 = ssub.s32 1, %s5
  %s8 = scalar_select 0, %s7, %s5
  $region1: #{tpu_custom_call.1} parent=0
    #allocation2 [shape = 'u8[65536]{0}', space=vmem, size = 0x10000, scoped, tag = 'output window, operand 0']
    #allocation3 [shape = 's32[2]{0}', space=sflag, size = 0x8, scoped, tag = 'scoped memory for tpu_custom_call.1']
    %9 = vsyncpa [#allocation3], 0
    %s10 = scalar_lea.sflag [#allocation3], 1
    %11 = vsyncpa %s10, 0
    loop: start=0, step=1, limit=4
    $region2: #{tpu_custom_call.1} parent=1 // loop_pre_header
      _
    $region3: #{tpu_custom_call.1} parent=1 // loop_header
      %s13 = sphi 0, %s17
      %p14 = scmp.ge.s32.totalorder %s13, 4
      %s23 = sphi 0, %s25
      %s26 = sphi 0, %s23
      %s27 = sphi 0, %s26
      %s43 = sphi 0, %s27
      %s55 = sphi 0, %s57
      %s58 = sphi 0, %s55
      %s59 = sphi 0, %s58
      %s75 = sphi 0, %s59
      %s81 = sphi 0, %s83
      %s84 = sphi 0, %s81
      %s85 = sphi 0, %s84
      %s101 = sphi 0, %s85
      %s105 = sphi 0, %s105
      %s107 = sphi 0, %s105
      %s108 = sphi 0, %s107
      %s122 = sphi 0, %s108
      %s128 = sphi 0, %s130
      %s131 = sphi 0, %s128
      %s132 = sphi 0, %s131
      %s148 = sphi 0, %s132
    $region4: #{tpu_custom_call.1} parent=1 // loop_header_branch
      %16 = sbr.rel (%p14) target = $region8
    $region5: #{tpu_custom_call.1} parent=1 // loop_body
      %s18 = ssub.s32 %s13, 1
      %s19 = ssub.s32 %s13, 2
      %s20 = sadd.s32 %s13, 1
      %s21 = ssub.s32 %s13, %s20
      %p22 = scmp.eq.s32.totalorder %s21, 0
      %s24 = sadd.s32 %s23, 1
      %s25 = scalar_select %p22, %s23, %s24
      %p28 = pneg %p22
      %p29 = scmp.eq.s32.totalorder %s13, 1
      %p30 = por %p28, %p29
      %p31 = scmp.ne.s32.totalorder %s23, %s26
      %p32 = scmp.eq.s32.totalorder %s13, 0
      %p33 = por %p31, %p32
      %p34 = scmp.ne.s32.totalorder %s23, %s26
      %p35 = scmp.eq.s32.totalorder %s18, 1
      %p36 = por %p34, %p35
      %p37 = scmp.ne.s32.totalorder %s26, %s27
      %p38 = scmp.eq.s32.totalorder %s18, 0
      %p39 = por %p37, %p38
      %p40 = scmp.ne.s32.totalorder %s26, %s27
      %p41 = scmp.eq.s32.totalorder %s19, 1
      %p42 = por %p40, %p41
      %p44 = scmp.ne.s32.totalorder %s27, %s43
      %p45 = scmp.eq.s32.totalorder %s19, 0
      %p46 = por %p44, %p45
      %s47 = ssub.s32 %s13, 1
      %p48 = scmp.gt.s32.totalorder %s47, 0
      %s49 = scalar_select %p48, %s47, 0
      %s50 = ssub.s32 %s20, 1
      %p51 = scmp.gt.s32.totalorder %s50, 0
      %s52 = scalar_select %p51, %s50, 0
      %s53 = ssub.s32 %s49, %s52
      %p54 = scmp.eq.s32.totalorder %s53, 0
      %s56 = sadd.s32 %s55, 1
      %s57 = scalar_select %p54, %s55, %s56
      %p60 = pneg %p54
      %p61 = scmp.eq.s32.totalorder %s13, 1
      %p62 = por %p60, %p61
      %p63 = scmp.ne.s32.totalorder %s55, %s58
      %p64 = scmp.eq.s32.totalorder %s13, 0
      %p65 = por %p63, %p64
      %p66 = scmp.ne.s32.totalorder %s55, %s58
      %p67 = scmp.eq.s32.totalorder %s18, 1
      %p68 = por %p66, %p67
      %p69 = scmp.ne.s32.totalorder %s58, %s59
      %p70 = scmp.eq.s32.totalorder %s18, 0
      %p71 = por %p69, %p70
      %p72 = scmp.ne.s32.totalorder %s58, %s59
      %p73 = scmp.eq.s32.totalorder %s19, 1
      %p74 = por %p72, %p73
      %p76 = scmp.ne.s32.totalorder %s59, %s75
      %p77 = scmp.eq.s32.totalorder %s19, 0
      %p78 = por %p76, %p77
      %s79 = ssub.s32 %s13, %s20
      %p80 = scmp.eq.s32.totalorder %s79, 0
      %s82 = sadd.s32 %s81, 1
      %s83 = scalar_select %p80, %s81, %s82
      %p86 = pneg %p80
      %p87 = scmp.eq.s32.totalorder %s13, 1
      %p88 = por %p86, %p87
      %p89 = scmp.ne.s32.totalorder %s81, %s84
      %p90 = scmp.eq.s32.totalorder %s13, 0
      %p91 = por %p89, %p90
      %p92 = scmp.ne.s32.totalorder %s81, %s84
      %p93 = scmp.eq.s32.totalorder %s18, 1
      %p94 = por %p92, %p93
      %p95 = scmp.ne.s32.totalorder %s84, %s85
      %p96 = scmp.eq.s32.totalorder %s18, 0
      %p97 = por %p95, %p96
      %p98 = scmp.ne.s32.totalorder %s84, %s85
      %p99 = scmp.eq.s32.totalorder %s19, 1
      %p100 = por %p98, %p99
      %p102 = scmp.ne.s32.totalorder %s85, %s101
      %p103 = scmp.eq.s32.totalorder %s19, 0
      %p104 = por %p102, %p103
      %s106 = sadd.s32 %s105, 1
      %p109 = scmp.eq.s32.totalorder %s13, 1
      %p110 = scmp.ne.s32.totalorder %s105, %s107
      %p111 = scmp.eq.s32.totalorder %s13, 0
      %p112 = por %p110, %p111
      %p113 = scmp.ne.s32.totalorder %s105, %s107
      %p114 = scmp.eq.s32.totalorder %s18, 1
      %p115 = por %p113, %p114
      %p116 = scmp.ne.s32.totalorder %s107, %s108
      %p117 = scmp.eq.s32.totalorder %s18, 0
      %p118 = por %p116, %p117
      %p119 = scmp.ne.s32.totalorder %s107, %s108
      %p120 = scmp.eq.s32.totalorder %s19, 1
      %p121 = por %p119, %p120
      %p123 = scmp.ne.s32.totalorder %s108, %s122
      %p124 = scmp.eq.s32.totalorder %s19, 0
      %p125 = por %p123, %p124
      %s126 = ssub.s32 %s13, %s20
      %p127 = scmp.eq.s32.totalorder %s126, 0
      %s129 = sadd.s32 %s128, 1
      %s130 = scalar_select %p127, %s128, %s129
      %p133 = pneg %p127
      %p134 = scmp.eq.s32.totalorder %s13, 1
      %p135 = por %p133, %p134
      %p136 = scmp.ne.s32.totalorder %s128, %s131
      %p137 = scmp.eq.s32.totalorder %s13, 0
      %p138 = por %p136, %p137
      %p139 = scmp.ne.s32.totalorder %s128, %s131
      %p140 = scmp.eq.s32.totalorder %s18, 1
      %p141 = por %p139, %p140
      %p142 = scmp.ne.s32.totalorder %s131, %s132
      %p143 = scmp.eq.s32.totalorder %s18, 0
      %p144 = por %p142, %p143
      %p145 = scmp.ne.s32.totalorder %s131, %s132
      %p146 = scmp.eq.s32.totalorder %s19, 1
      %p147 = por %p145, %p146
      %p149 = scmp.ne.s32.totalorder %s132, %s148
      %p150 = scmp.eq.s32.totalorder %s19, 0
      %p151 = por %p149, %p150
      %p152 = scmp.le.s32.totalorder 1, %s13
      %p153 = scmp.lt.s32.totalorder %s13, 3
      %p154 = pnand %p152, %p153
      %p155 = pneg %p154
      // Predicated region
      $region9: #{tpu_custom_call.1} parent=5 // pred_check
        _
      $region10: #{tpu_custom_call.1} parent=5 // pred_check_branch
        %157 = sbr.rel (%p154) target = $region12
      $region11: #{tpu_custom_call.1} parent=5 // pred_region
        %s158 = ssub.s32 %s13, 1
        // Predicated region
        $region13: #{tpu_custom_call.1} parent=11 // pred_check
          %p159 = pneg %p118
        $region14: #{tpu_custom_call.1} parent=11 // pred_check_branch
          %161 = sbr.rel (%p159) target = $region16
        $region15: #{tpu_custom_call.1} parent=11 // pred_region
          _
        $region16: #{tpu_custom_call.1} parent=11 // pred_fallthru
          _
      $region12: #{tpu_custom_call.1} parent=5 // pred_fallthru
        _
      %p162 = scmp.lt.s32.totalorder %s13, 2
      // Predicated region
      $region17: #{tpu_custom_call.1} parent=5 // pred_check
        %p163 = pneg %p162
      $region18: #{tpu_custom_call.1} parent=5 // pred_check_branch
        %165 = sbr.rel (%p163) target = $region20
      $region19: #{tpu_custom_call.1} parent=5 // pred_region
        // Predicated region
        $region21: #{tpu_custom_call.1} parent=19 // pred_check
          %p166 = pneg %p33
        $region22: #{tpu_custom_call.1} parent=19 // pred_check_branch
          %168 = sbr.rel (%p166) target = $region24
        $region23: #{tpu_custom_call.1} parent=19 // pred_region
          %s169 = smul.u32 16, %s13
          %p170 = scmp.lt.s32.totalorder %s169, 31
          %s171 = scalar_select %p170, %s169, 31
          %s172 = smul.addr %s171, 8
          %s173 = scalar_lea.vmem %s0, %s172
          %s174 = smul.u32 16, %s13
        $region24: #{tpu_custom_call.1} parent=19 // pred_fallthru
          _
        // Predicated region
        $region25: #{tpu_custom_call.1} parent=19 // pred_check
          %p175 = pneg %p65
        $region26: #{tpu_custom_call.1} parent=19 // pred_check_branch
          %177 = sbr.rel (%p175) target = $region28
        $region27: #{tpu_custom_call.1} parent=19 // pred_region
          %s178 = ssub.s32 %s13, 1
          %p179 = scmp.gt.s32.totalorder %s178, 0
          %s180 = scalar_select %p179, %s178, 0
          %p181 = scmp.lt.s32.totalorder %s180, 1
          %s182 = scalar_select %p181, %s180, 1
          %s183 = smul.addr %s182, 4
          %s184 = scalar_lea.vmem %s1, %s183
          %s185 = ssub.s32 %s13, 1
          %p186 = scmp.gt.s32.totalorder %s185, 0
          %s187 = scalar_select %p186, %s185, 0
        $region28: #{tpu_custom_call.1} parent=19 // pred_fallthru
          _
        // Predicated region
        $region29: #{tpu_custom_call.1} parent=19 // pred_check
          %p188 = pneg %p91
        $region30: #{tpu_custom_call.1} parent=19 // pred_check_branch
          %190 = sbr.rel (%p188) target = $region32
        $region31: #{tpu_custom_call.1} parent=19 // pred_region
          %p191 = scmp.lt.s32.totalorder %s13, 1
          %s192 = scalar_select %p191, %s13, 1
          %s193 = smul.addr %s192, 4
          %s194 = scalar_lea.vmem %s2, %s193
        $region32: #{tpu_custom_call.1} parent=19 // pred_fallthru
          _
      $region20: #{tpu_custom_call.1} parent=5 // pred_fallthru
        _
      %p195 = scmp.le.s32.totalorder 1, %s13
      %p196 = scmp.lt.s32.totalorder %s13, 3
      %p197 = pnand %p195, %p196
      %p198 = pneg %p197
      // Predicated region
      $region33: #{tpu_custom_call.1} parent=5 // pred_check
        _
      $region34: #{tpu_custom_call.1} parent=5 // pred_check_branch
        %200 = sbr.rel (%p197) target = $region36
      $region35: #{tpu_custom_call.1} parent=5 // pred_region
        %s201 = ssub.s32 %s13, 1
        %s202 = smul.u32 16, %s18
        %p203 = scmp.lt.s32.totalorder %s202, 31
        %s204 = scalar_select %p203, %s202, 31
        %s205 = smul.addr %s204, 8
        %s206 = scalar_lea.vmem %s0, %s205
        %p207 = pneg %p39
        %p208 = pneg %p36
        %s209 = ssub.s32 %s18, 1
        %p210 = scmp.gt.s32.totalorder %s209, 0
        %s211 = scalar_select %p210, %s209, 0
        %p212 = scmp.lt.s32.totalorder %s211, 1
        %s213 = scalar_select %p212, %s211, 1
        %s214 = smul.addr %s213, 4
        %s215 = scalar_lea.vmem %s1, %s214
        %p216 = pneg %p71
        %p217 = pneg %p68
        %p218 = scmp.lt.s32.totalorder %s18, 1
        %s219 = scalar_select %p218, %s18, 1
        %s220 = smul.addr %s219, 4
        %s221 = scalar_lea.vmem %s2, %s220
        %p222 = pneg %p97
        %p223 = pneg %p94
        %p224 = pneg %p118
        %p225 = pneg %p115
        %p226 = pneg %p144
        %p227 = pneg %p141
        %s228 = sand.u32 %s131, 1
        %s229 = scalar_lea.sflag [#allocation3], %s228
        %s230 = sand.u32 %s131, 1
        %s231 = smul.addr %s230, 64
        %s232 = scalar_lea.vmem [#allocation2], %s231
        %s233 = smul.u32 16, %s18
        %p234 = scmp.lt.s32.totalorder %s233, 31
        %s235 = scalar_select %p234, %s233, 31
        %s236 = smul.addr %s235, 8
        %s237 = scalar_lea.vmem %s0, %s236
        %s238 = smul.u32 16, %s18
        %s239 = ssub.s32 %s18, 1
        %p240 = scmp.gt.s32.totalorder %s239, 0
        %s241 = scalar_select %p240, %s239, 0
        %p242 = scmp.lt.s32.totalorder %s241, 1
        %s243 = scalar_select %p242, %s241, 1
        %s244 = smul.addr %s243, 4
        %s245 = scalar_lea.vmem %s1, %s244
        %s246 = ssub.s32 %s18, 1
        %p247 = scmp.gt.s32.totalorder %s246, 0
        %s248 = scalar_select %p247, %s246, 0
        %p249 = scmp.lt.s32.totalorder %s18, 1
        %s250 = scalar_select %p249, %s18, 1
        %s251 = smul.addr %s250, 4
        %s252 = scalar_lea.vmem %s2, %s251
        %s253 = smul.u32 4, %s18
        %s256 = smul.u32 %s18, 128
        %v257 = vld [vmem:[%s237] sm:$0xff]
        %v258 = vld [vmem:[%s237 + $0x8] sm:$0xff]
        %v259 = vld [vmem:[%s237 + $0x10] sm:$0xff]
        %v260 = vld [vmem:[%s237 + $0x18] sm:$0xff]
        %v261 = vld [vmem:[%s237 + $0x20] sm:$0xff]
        %v262 = vld [vmem:[%s237 + $0x28] sm:$0xff]
        %v263 = vld [vmem:[%s237 + $0x30] sm:$0xff]
        %v264 = vld [vmem:[%s237 + $0x38] sm:$0xff]
        %v265 = vld [vmem:[%s237 + $0x40] sm:$0xff]
        %v266 = vld [vmem:[%s237 + $0x48] sm:$0xff]
        %v267 = vld [vmem:[%s237 + $0x50] sm:$0xff]
        %v268 = vld [vmem:[%s237 + $0x58] sm:$0xff]
        %v269 = vld [vmem:[%s237 + $0x60] sm:$0xff]
        %v270 = vld [vmem:[%s237 + $0x68] sm:$0xff]
        %v271 = vld [vmem:[%s237 + $0x70] sm:$0xff]
        %v272 = vld [vmem:[%s237 + $0x78] sm:$0xff]
        %v273 = vld [vmem:[%s245] sm:$0xf]
        %v274 = vld [vmem:[%s252] sm:$0xf]
        %v275 = vlaneseq
        %v276 = vshrl.u32 %v275, 7
        %v277 = vadd.s32 %v276, 8
        %v278 = vadd.s32 %v276, 16
        %v279 = vadd.s32 %v276, 24
        %v280 = vadd.s32 %v276, 32
        %v281 = vadd.s32 %v276, 40
        %v282 = vadd.s32 %v276, 48
        %v283 = vadd.s32 %v276, 56
        %v284 = vadd.s32 %v276, 64
        %v285 = vadd.s32 %v276, 72
        %v286 = vadd.s32 %v276, 80
        %v287 = vadd.s32 %v276, 88
        %v288 = vadd.s32 %v276, 96
        %v289 = vadd.s32 %v276, 104
        %v290 = vadd.s32 %v276, 112
        %v291 = vadd.s32 %v276, 120
        %v292 = vstv %s256
        %v293 = vadd.s32 %v292, %v276
        %v294 = vadd.s32 %v292, %v277
        %v295 = vadd.s32 %v292, %v278
        %v296 = vadd.s32 %v292, %v279
        %v297 = vadd.s32 %v292, %v280
        %v298 = vadd.s32 %v292, %v281
        %v299 = vadd.s32 %v292, %v282
        %v300 = vadd.s32 %v292, %v283
        %v301 = vadd.s32 %v292, %v284
        %v302 = vadd.s32 %v292, %v285
        %v303 = vadd.s32 %v292, %v286
        %v304 = vadd.s32 %v292, %v287
        %v305 = vadd.s32 %v292, %v288
        %v306 = vadd.s32 %v292, %v289
        %v307 = vadd.s32 %v292, %v290
        %v308 = vadd.s32 %v292, %v291
        %s309 = ssub.s32 %s256, 128
        %v310 = vlaneseq
        %v311 = vand.u32 %v310, 127
        %v312 = vadd.s32 %v311, 128
        %v313 = vstv %s309
        %v314 = vadd.s32 %v313, %v311
        %v315 = vadd.s32 %v313, %v312
        %316 = vset.pattern.permute.xlu0 0
        %317 = vperm.xlu0 %316, %v257
        %v318 = vpop.permute.xlu0 %317
        %319 = vset.pattern.permute.xlu0 0
        %320 = vperm.xlu0 %319, %v258
        %v321 = vpop.permute.xlu0 %320
        %322 = vset.pattern.permute.xlu0 0
        %323 = vperm.xlu0 %322, %v259
        %v324 = vpop.permute.xlu0 %323
        %325 = vset.pattern.permute.xlu0 0
        %326 = vperm.xlu0 %325, %v260
        %v327 = vpop.permute.xlu0 %326
        %328 = vset.pattern.permute.xlu0 0
        %329 = vperm.xlu0 %328, %v261
        %v330 = vpop.permute.xlu0 %329
        %331 = vset.pattern.permute.xlu0 0
        %332 = vperm.xlu0 %331, %v262
        %v333 = vpop.permute.xlu0 %332
        %334 = vset.pattern.permute.xlu0 0
        %335 = vperm.xlu0 %334, %v263
        %v336 = vpop.permute.xlu0 %335
        %337 = vset.pattern.permute.xlu0 0
        %338 = vperm.xlu0 %337, %v264
        %v339 = vpop.permute.xlu0 %338
        %340 = vset.pattern.permute.xlu0 0
        %341 = vperm.xlu0 %340, %v265
        %v342 = vpop.permute.xlu0 %341
        %343 = vset.pattern.permute.xlu0 0
        %344 = vperm.xlu0 %343, %v266
        %v345 = vpop.permute.xlu0 %344
        %346 = vset.pattern.permute.xlu0 0
        %347 = vperm.xlu0 %346, %v267
        %v348 = vpop.permute.xlu0 %347
        %349 = vset.pattern.permute.xlu0 0
        %350 = vperm.xlu0 %349, %v268
        %v351 = vpop.permute.xlu0 %350
        %352 = vset.pattern.permute.xlu0 0
        %353 = vperm.xlu0 %352, %v269
        %v354 = vpop.permute.xlu0 %353
        %355 = vset.pattern.permute.xlu0 0
        %356 = vperm.xlu0 %355, %v270
        %v357 = vpop.permute.xlu0 %356
        %358 = vset.pattern.permute.xlu0 0
        %359 = vperm.xlu0 %358, %v271
        %v360 = vpop.permute.xlu0 %359
        %361 = vset.pattern.permute.xlu0 0
        %362 = vperm.xlu0 %361, %v272
        %v363 = vpop.permute.xlu0 %362
        %v364 = vlaneseq
        %v365 = vshrl.u32 %v364, 7
        %v366 = vsub.s32 0, %v365
        %v367 = vrot.slane %v273, %v366
        %v368 = vlaneseq
        %v369 = vshrl.u32 %v368, 7
        %v370 = vsub.s32 0, %v369
        %v371 = vrot.slane %v274, %v370
        %v372 = vsub.s32 %v318, %v367
        %v373 = vsub.s32 %v318, %v371
        %v374 = vsub.s32 %v321, %v367
        %v375 = vsub.s32 %v321, %v371
        %v376 = vsub.s32 %v324, %v367
        %v377 = vsub.s32 %v324, %v371
        %v378 = vsub.s32 %v327, %v367
        %v379 = vsub.s32 %v327, %v371
        %v380 = vsub.s32 %v330, %v367
        %v381 = vsub.s32 %v330, %v371
        %v382 = vsub.s32 %v333, %v367
        %v383 = vsub.s32 %v333, %v371
        %v384 = vsub.s32 %v336, %v367
        %v385 = vsub.s32 %v336, %v371
        %v386 = vsub.s32 %v339, %v367
        %v387 = vsub.s32 %v339, %v371
        %v388 = vsub.s32 %v342, %v367
        %v389 = vsub.s32 %v342, %v371
        %v390 = vsub.s32 %v345, %v367
        %v391 = vsub.s32 %v345, %v371
        %v392 = vsub.s32 %v348, %v367
        %v393 = vsub.s32 %v348, %v371
        %v394 = vsub.s32 %v351, %v367
        %v395 = vsub.s32 %v351, %v371
        %v396 = vsub.s32 %v354, %v367
        %v397 = vsub.s32 %v354, %v371
        %v398 = vsub.s32 %v357, %v367
        %v399 = vsub.s32 %v357, %v371
        %v400 = vsub.s32 %v360, %v367
        %v401 = vsub.s32 %v360, %v371
        %v402 = vsub.s32 %v363, %v367
        %v403 = vsub.s32 %v363, %v371
        %404 = vset.pattern.permute.xlu0 1
        %405 = vperm.xlu0 %404, %v257
        %v406 = vpop.permute.xlu0 %405
        %407 = vset.pattern.permute.xlu0 1
        %408 = vperm.xlu0 %407, %v258
        %v409 = vpop.permute.xlu0 %408
        %410 = vset.pattern.permute.xlu0 1
        %411 = vperm.xlu0 %410, %v259
        %v412 = vpop.permute.xlu0 %411
        %413 = vset.pattern.permute.xlu0 1
        %414 = vperm.xlu0 %413, %v260
        %v415 = vpop.permute.xlu0 %414
        %416 = vset.pattern.permute.xlu0 1
        %417 = vperm.xlu0 %416, %v261
        %v418 = vpop.permute.xlu0 %417
        %419 = vset.pattern.permute.xlu0 1
        %420 = vperm.xlu0 %419, %v262
        %v421 = vpop.permute.xlu0 %420
        %422 = vset.pattern.permute.xlu0 1
        %423 = vperm.xlu0 %422, %v263
        %v424 = vpop.permute.xlu0 %423
        %425 = vset.pattern.permute.xlu0 1
        %426 = vperm.xlu0 %425, %v264
        %v427 = vpop.permute.xlu0 %426
        %428 = vset.pattern.permute.xlu0 1
        %429 = vperm.xlu0 %428, %v265
        %v430 = vpop.permute.xlu0 %429
        %431 = vset.pattern.permute.xlu0 1
        %432 = vperm.xlu0 %431, %v266
        %v433 = vpop.permute.xlu0 %432
        %434 = vset.pattern.permute.xlu0 1
        %435 = vperm.xlu0 %434, %v267
        %v436 = vpop.permute.xlu0 %435
        %437 = vset.pattern.permute.xlu0 1
        %438 = vperm.xlu0 %437, %v268
        %v439 = vpop.permute.xlu0 %438
        %440 = vset.pattern.permute.xlu0 1
        %441 = vperm.xlu0 %440, %v269
        %v442 = vpop.permute.xlu0 %441
        %443 = vset.pattern.permute.xlu0 1
        %444 = vperm.xlu0 %443, %v270
        %v445 = vpop.permute.xlu0 %444
        %446 = vset.pattern.permute.xlu0 1
        %447 = vperm.xlu0 %446, %v271
        %v448 = vpop.permute.xlu0 %447
        %449 = vset.pattern.permute.xlu0 1
        %450 = vperm.xlu0 %449, %v272
        %v451 = vpop.permute.xlu0 %450
        %v452 = vlaneseq
        %v453 = vshrl.u32 %v452, 7
        %v454 = vsub.s32 1, %v453
        %v455 = vrot.slane %v273, %v454
        %v456 = vlaneseq
        %v457 = vshrl.u32 %v456, 7
        %v458 = vsub.s32 1, %v457
        %v459 = vrot.slane %v274, %v458
        %v460 = vsub.s32 %v406, %v455
        %v461 = vsub.s32 %v406, %v459
        %v462 = vsub.s32 %v409, %v455
        %v463 = vsub.s32 %v409, %v459
        %v464 = vsub.s32 %v412, %v455
        %v465 = vsub.s32 %v412, %v459
        %v466 = vsub.s32 %v415, %v455
        %v467 = vsub.s32 %v415, %v459
        %v468 = vsub.s32 %v418, %v455
        %v469 = vsub.s32 %v418, %v459
        %v470 = vsub.s32 %v421, %v455
        %v471 = vsub.s32 %v421, %v459
        %v472 = vsub.s32 %v424, %v455
        %v473 = vsub.s32 %v424, %v459
        %v474 = vsub.s32 %v427, %v455
        %v475 = vsub.s32 %v427, %v459
        %v476 = vsub.s32 %v430, %v455
        %v477 = vsub.s32 %v430, %v459
        %v478 = vsub.s32 %v433, %v455
        %v479 = vsub.s32 %v433, %v459
        %v480 = vsub.s32 %v436, %v455
        %v481 = vsub.s32 %v436, %v459
        %v482 = vsub.s32 %v439, %v455
        %v483 = vsub.s32 %v439, %v459
        %v484 = vsub.s32 %v442, %v455
        %v485 = vsub.s32 %v442, %v459
        %v486 = vsub.s32 %v445, %v455
        %v487 = vsub.s32 %v445, %v459
        %v488 = vsub.s32 %v448, %v455
        %v489 = vsub.s32 %v448, %v459
        %v490 = vsub.s32 %v451, %v455
        %v491 = vsub.s32 %v451, %v459
        %492 = vset.pattern.permute.xlu0 2
        %493 = vperm.xlu0 %492, %v257
        %v494 = vpop.permute.xlu0 %493
        %495 = vset.pattern.permute.xlu0 2
        %496 = vperm.xlu0 %495, %v258
        %v497 = vpop.permute.xlu0 %496
        %498 = vset.pattern.permute.xlu0 2
        %499 = vperm.xlu0 %498, %v259
        %v500 = vpop.permute.xlu0 %499
        %501 = vset.pattern.permute.xlu0 2
        %502 = vperm.xlu0 %501, %v260
        %v503 = vpop.permute.xlu0 %502
        %504 = vset.pattern.permute.xlu0 2
        %505 = vperm.xlu0 %504, %v261
        %v506 = vpop.permute.xlu0 %505
        %507 = vset.pattern.permute.xlu0 2
        %508 = vperm.xlu0 %507, %v262
        %v509 = vpop.permute.xlu0 %508
        %510 = vset.pattern.permute.xlu0 2
        %511 = vperm.xlu0 %510, %v263
        %v512 = vpop.permute.xlu0 %511
        %513 = vset.pattern.permute.xlu0 2
        %514 = vperm.xlu0 %513, %v264
        %v515 = vpop.permute.xlu0 %514
        %516 = vset.pattern.permute.xlu0 2
        %517 = vperm.xlu0 %516, %v265
        %v518 = vpop.permute.xlu0 %517
        %519 = vset.pattern.permute.xlu0 2
        %520 = vperm.xlu0 %519, %v266
        %v521 = vpop.permute.xlu0 %520
        %522 = vset.pattern.permute.xlu0 2
        %523 = vperm.xlu0 %522, %v267
        %v524 = vpop.permute.xlu0 %523
        %525 = vset.pattern.permute.xlu0 2
        %526 = vperm.xlu0 %525, %v268
        %v527 = vpop.permute.xlu0 %526
        %528 = vset.pattern.permute.xlu0 2
        %529 = vperm.xlu0 %528, %v269
        %v530 = vpop.permute.xlu0 %529
        %531 = vset.pattern.permute.xlu0 2
        %532 = vperm.xlu0 %531, %v270
        %v533 = vpop.permute.xlu0 %532
        %534 = vset.pattern.permute.xlu0 2
        %535 = vperm.xlu0 %534, %v271
        %v536 = vpop.permute.xlu0 %535
        %537 = vset.pattern.permute.xlu0 2
        %538 = vperm.xlu0 %537, %v272
        %v539 = vpop.permute.xlu0 %538
        %v540 = vlaneseq
        %v541 = vshrl.u32 %v540, 7
        %v542 = vsub.s32 2, %v541
        %v543 = vrot.slane %v273, %v542
        %v544 = vlaneseq
        %v545 = vshrl.u32 %v544, 7
        %v546 = vsub.s32 2, %v545
        %v547 = vrot.slane %v274, %v546
        %v548 = vsub.s32 %v494, %v543
        %v549 = vsub.s32 %v494, %v547
        %v550 = vsub.s32 %v497, %v543
        %v551 = vsub.s32 %v497, %v547
        %v552 = vsub.s32 %v500, %v543
        %v553 = vsub.s32 %v500, %v547
        %v554 = vsub.s32 %v503, %v543
        %v555 = vsub.s32 %v503, %v547
        %v556 = vsub.s32 %v506, %v543
        %v557 = vsub.s32 %v506, %v547
        %v558 = vsub.s32 %v509, %v543
        %v559 = vsub.s32 %v509, %v547
        %v560 = vsub.s32 %v512, %v543
        %v561 = vsub.s32 %v512, %v547
        %v562 = vsub.s32 %v515, %v543
        %v563 = vsub.s32 %v515, %v547
        %v564 = vsub.s32 %v518, %v543
        %v565 = vsub.s32 %v518, %v547
        %v566 = vsub.s32 %v521, %v543
        %v567 = vsub.s32 %v521, %v547
        %v568 = vsub.s32 %v524, %v543
        %v569 = vsub.s32 %v524, %v547
        %v570 = vsub.s32 %v527, %v543
        %v571 = vsub.s32 %v527, %v547
        %v572 = vsub.s32 %v530, %v543
        %v573 = vsub.s32 %v530, %v547
        %v574 = vsub.s32 %v533, %v543
        %v575 = vsub.s32 %v533, %v547
        %v576 = vsub.s32 %v536, %v543
        %v577 = vsub.s32 %v536, %v547
        %v578 = vsub.s32 %v539, %v543
        %v579 = vsub.s32 %v539, %v547
        %vm580 = vcmp.lt.s32.totalorder %v314, %v293
        %vm581 = vcmp.lt.s32.totalorder %v315, %v293
        %vm582 = vcmp.lt.s32.totalorder %v314, %v294
        %vm583 = vcmp.lt.s32.totalorder %v315, %v294
        %vm584 = vcmp.lt.s32.totalorder %v314, %v295
        %vm585 = vcmp.lt.s32.totalorder %v315, %v295
        %vm586 = vcmp.lt.s32.totalorder %v314, %v296
        %vm587 = vcmp.lt.s32.totalorder %v315, %v296
        %vm588 = vcmp.lt.s32.totalorder %v314, %v297
        %vm589 = vcmp.lt.s32.totalorder %v315, %v297
        %vm590 = vcmp.lt.s32.totalorder %v314, %v298
        %vm591 = vcmp.lt.s32.totalorder %v315, %v298
        %vm592 = vcmp.lt.s32.totalorder %v314, %v299
        %vm593 = vcmp.lt.s32.totalorder %v315, %v299
        %vm594 = vcmp.lt.s32.totalorder %v314, %v300
        %vm595 = vcmp.lt.s32.totalorder %v315, %v300
        %vm596 = vcmp.lt.s32.totalorder %v314, %v301
        %vm597 = vcmp.lt.s32.totalorder %v315, %v301
        %vm598 = vcmp.lt.s32.totalorder %v314, %v302
        %vm599 = vcmp.lt.s32.totalorder %v315, %v302
        %vm600 = vcmp.lt.s32.totalorder %v314, %v303
        %vm601 = vcmp.lt.s32.totalorder %v315, %v303
        %vm602 = vcmp.lt.s32.totalorder %v314, %v304
        %vm603 = vcmp.lt.s32.totalorder %v315, %v304
        %vm604 = vcmp.lt.s32.totalorder %v314, %v305
        %vm605 = vcmp.lt.s32.totalorder %v315, %v305
        %vm606 = vcmp.lt.s32.totalorder %v314, %v306
        %vm607 = vcmp.lt.s32.totalorder %v315, %v306
        %vm608 = vcmp.lt.s32.totalorder %v314, %v307
        %vm609 = vcmp.lt.s32.totalorder %v315, %v307
        %vm610 = vcmp.lt.s32.totalorder %v314, %v308
        %vm611 = vcmp.lt.s32.totalorder %v315, %v308
        %v612 = vsub.s32 %v293, %v314
        %v613 = vsub.s32 %v293, %v315
        %v614 = vsub.s32 %v294, %v314
        %v615 = vsub.s32 %v294, %v315
        %v616 = vsub.s32 %v295, %v314
        %v617 = vsub.s32 %v295, %v315
        %v618 = vsub.s32 %v296, %v314
        %v619 = vsub.s32 %v296, %v315
        %v620 = vsub.s32 %v297, %v314
        %v621 = vsub.s32 %v297, %v315
        %v622 = vsub.s32 %v298, %v314
        %v623 = vsub.s32 %v298, %v315
        %v624 = vsub.s32 %v299, %v314
        %v625 = vsub.s32 %v299, %v315
        %v626 = vsub.s32 %v300, %v314
        %v627 = vsub.s32 %v300, %v315
        %v628 = vsub.s32 %v301, %v314
        %v629 = vsub.s32 %v301, %v315
        %v630 = vsub.s32 %v302, %v314
        %v631 = vsub.s32 %v302, %v315
        %v632 = vsub.s32 %v303, %v314
        %v633 = vsub.s32 %v303, %v315
        %v634 = vsub.s32 %v304, %v314
        %v635 = vsub.s32 %v304, %v315
        %v636 = vsub.s32 %v305, %v314
        %v637 = vsub.s32 %v305, %v315
        %v638 = vsub.s32 %v306, %v314
        %v639 = vsub.s32 %v306, %v315
        %v640 = vsub.s32 %v307, %v314
        %v641 = vsub.s32 %v307, %v315
        %v642 = vsub.s32 %v308, %v314
        %v643 = vsub.s32 %v308, %v315
        %vm644 = vcmp.le.s32.totalorder %v612, 128
        %vm645 = vcmp.le.s32.totalorder %v613, 128
        %vm646 = vcmp.le.s32.totalorder %v614, 128
        %vm647 = vcmp.le.s32.totalorder %v615, 128
        %vm648 = vcmp.le.s32.totalorder %v616, 128
        %vm649 = vcmp.le.s32.totalorder %v617, 128
        %vm650 = vcmp.le.s32.totalorder %v618, 128
        %vm651 = vcmp.le.s32.totalorder %v619, 128
        %vm652 = vcmp.le.s32.totalorder %v620, 128
        %vm653 = vcmp.le.s32.totalorder %v621, 128
        %vm654 = vcmp.le.s32.totalorder %v622, 128
        %vm655 = vcmp.le.s32.totalorder %v623, 128
        %vm656 = vcmp.le.s32.totalorder %v624, 128
        %vm657 = vcmp.le.s32.totalorder %v625, 128
        %vm658 = vcmp.le.s32.totalorder %v626, 128
        %vm659 = vcmp.le.s32.totalorder %v627, 128
        %vm660 = vcmp.le.s32.totalorder %v628, 128
        %vm661 = vcmp.le.s32.totalorder %v629, 128
        %vm662 = vcmp.le.s32.totalorder %v630, 128
        %vm663 = vcmp.le.s32.totalorder %v631, 128
        %vm664 = vcmp.le.s32.totalorder %v632, 128
        %vm665 = vcmp.le.s32.totalorder %v633, 128
        %vm666 = vcmp.le.s32.totalorder %v634, 128
        %vm667 = vcmp.le.s32.totalorder %v635, 128
        %vm668 = vcmp.le.s32.totalorder %v636, 128
        %vm669 = vcmp.le.s32.totalorder %v637, 128
        %vm670 = vcmp.le.s32.totalorder %v638, 128
        %vm671 = vcmp.le.s32.totalorder %v639, 128
        %vm672 = vcmp.le.s32.totalorder %v640, 128
        %vm673 = vcmp.le.s32.totalorder %v641, 128
        %vm674 = vcmp.le.s32.totalorder %v642, 128
        %vm675 = vcmp.le.s32.totalorder %v643, 128
        %vm676 = vmand %vm580, %vm644
        %vm677 = vmand %vm581, %vm645
        %vm678 = vmand %vm582, %vm646
        %vm679 = vmand %vm583, %vm647
        %vm680 = vmand %vm584, %vm648
        %vm681 = vmand %vm585, %vm649
        %vm682 = vmand %vm586, %vm650
        %vm683 = vmand %vm587, %vm651
        %vm684 = vmand %vm588, %vm652
        %vm685 = vmand %vm589, %vm653
        %vm686 = vmand %vm590, %vm654
        %vm687 = vmand %vm591, %vm655
        %vm688 = vmand %vm592, %vm656
        %vm689 = vmand %vm593, %vm657
        %vm690 = vmand %vm594, %vm658
        %vm691 = vmand %vm595, %vm659
        %vm692 = vmand %vm596, %vm660
        %vm693 = vmand %vm597, %vm661
        %vm694 = vmand %vm598, %vm662
        %vm695 = vmand %vm599, %vm663
        %vm696 = vmand %vm600, %vm664
        %vm697 = vmand %vm601, %vm665
        %vm698 = vmand %vm602, %vm666
        %vm699 = vmand %vm603, %vm667
        %vm700 = vmand %vm604, %vm668
        %vm701 = vmand %vm605, %vm669
        %vm702 = vmand %vm606, %vm670
        %vm703 = vmand %vm607, %vm671
        %vm704 = vmand %vm608, %vm672
        %vm705 = vmand %vm609, %vm673
        %vm706 = vmand %vm610, %vm674
        %vm707 = vmand %vm611, %vm675
        %vm708 = vcmp.ge.s32.totalorder %v314, 0
        %vm709 = vcmp.ge.s32.totalorder %v315, 0
        %vm710 = vmand %vm676, %vm708
        %vm711 = vmand %vm677, %vm709
        %vm712 = vmand %vm678, %vm708
        %vm713 = vmand %vm679, %vm709
        %vm714 = vmand %vm680, %vm708
        %vm715 = vmand %vm681, %vm709
        %vm716 = vmand %vm682, %vm708
        %vm717 = vmand %vm683, %vm709
        %vm718 = vmand %vm684, %vm708
        %vm719 = vmand %vm685, %vm709
        %vm720 = vmand %vm686, %vm708
        %vm721 = vmand %vm687, %vm709
        %vm722 = vmand %vm688, %vm708
        %vm723 = vmand %vm689, %vm709
        %vm724 = vmand %vm690, %vm708
        %vm725 = vmand %vm691, %vm709
        %vm726 = vmand %vm692, %vm708
        %vm727 = vmand %vm693, %vm709
        %vm728 = vmand %vm694, %vm708
        %vm729 = vmand %vm695, %vm709
        %vm730 = vmand %vm696, %vm708
        %vm731 = vmand %vm697, %vm709
        %vm732 = vmand %vm698, %vm708
        %vm733 = vmand %vm699, %vm709
        %vm734 = vmand %vm700, %vm708
        %vm735 = vmand %vm701, %vm709
        %vm736 = vmand %vm702, %vm708
        %vm737 = vmand %vm703, %vm709
        %vm738 = vmand %vm704, %vm708
        %vm739 = vmand %vm705, %vm709
        %vm740 = vmand %vm706, %vm708
        %vm741 = vmand %vm707, %vm709
        %742 = vset.pattern.permute.xlu0 3
        %743 = vperm.xlu0 %742, %v257
        %v744 = vpop.permute.xlu0 %743
        %745 = vset.pattern.permute.xlu0 3
        %746 = vperm.xlu0 %745, %v258
        %v747 = vpop.permute.xlu0 %746
        %748 = vset.pattern.permute.xlu0 3
        %749 = vperm.xlu0 %748, %v259
        %v750 = vpop.permute.xlu0 %749
        %751 = vset.pattern.permute.xlu0 3
        %752 = vperm.xlu0 %751, %v260
        %v753 = vpop.permute.xlu0 %752
        %754 = vset.pattern.permute.xlu0 3
        %755 = vperm.xlu0 %754, %v261
        %v756 = vpop.permute.xlu0 %755
        %757 = vset.pattern.permute.xlu0 3
        %758 = vperm.xlu0 %757, %v262
        %v759 = vpop.permute.xlu0 %758
        %760 = vset.pattern.permute.xlu0 3
        %761 = vperm.xlu0 %760, %v263
        %v762 = vpop.permute.xlu0 %761
        %763 = vset.pattern.permute.xlu0 3
        %764 = vperm.xlu0 %763, %v264
        %v765 = vpop.permute.xlu0 %764
        %766 = vset.pattern.permute.xlu0 3
        %767 = vperm.xlu0 %766, %v265
        %v768 = vpop.permute.xlu0 %767
        %769 = vset.pattern.permute.xlu0 3
        %770 = vperm.xlu0 %769, %v266
        %v771 = vpop.permute.xlu0 %770
        %772 = vset.pattern.permute.xlu0 3
        %773 = vperm.xlu0 %772, %v267
        %v774 = vpop.permute.xlu0 %773
        %775 = vset.pattern.permute.xlu0 3
        %776 = vperm.xlu0 %775, %v268
        %v777 = vpop.permute.xlu0 %776
        %778 = vset.pattern.permute.xlu0 3
        %779 = vperm.xlu0 %778, %v269
        %v780 = vpop.permute.xlu0 %779
        %781 = vset.pattern.permute.xlu0 3
        %782 = vperm.xlu0 %781, %v270
        %v783 = vpop.permute.xlu0 %782
        %784 = vset.pattern.permute.xlu0 3
        %785 = vperm.xlu0 %784, %v271
        %v786 = vpop.permute.xlu0 %785
        %787 = vset.pattern.permute.xlu0 3
        %788 = vperm.xlu0 %787, %v272
        %v789 = vpop.permute.xlu0 %788
        %v790 = vlaneseq
        %v791 = vshrl.u32 %v790, 7
        %v792 = vsub.s32 3, %v791
        %v793 = vrot.slane %v273, %v792
        %v794 = vlaneseq
        %v795 = vshrl.u32 %v794, 7
        %v796 = vsub.s32 3, %v795
        %v797 = vrot.slane %v274, %v796
        %vm798 = vcmp.eq.s32.totalorder %v744, %v793
        %vm799 = vcmp.eq.s32.totalorder %v744, %v797
        %vm800 = vcmp.eq.s32.totalorder %v747, %v793
        %vm801 = vcmp.eq.s32.totalorder %v747, %v797
        %vm802 = vcmp.eq.s32.totalorder %v750, %v793
        %vm803 = vcmp.eq.s32.totalorder %v750, %v797
        %vm804 = vcmp.eq.s32.totalorder %v753, %v793
        %vm805 = vcmp.eq.s32.totalorder %v753, %v797
        %vm806 = vcmp.eq.s32.totalorder %v756, %v793
        %vm807 = vcmp.eq.s32.totalorder %v756, %v797
        %vm808 = vcmp.eq.s32.totalorder %v759, %v793
        %vm809 = vcmp.eq.s32.totalorder %v759, %v797
        %vm810 = vcmp.eq.s32.totalorder %v762, %v793
        %vm811 = vcmp.eq.s32.totalorder %v762, %v797
        %vm812 = vcmp.eq.s32.totalorder %v765, %v793
        %vm813 = vcmp.eq.s32.totalorder %v765, %v797
        %vm814 = vcmp.eq.s32.totalorder %v768, %v793
        %vm815 = vcmp.eq.s32.totalorder %v768, %v797
        %vm816 = vcmp.eq.s32.totalorder %v771, %v793
        %vm817 = vcmp.eq.s32.totalorder %v771, %v797
        %vm818 = vcmp.eq.s32.totalorder %v774, %v793
        %vm819 = vcmp.eq.s32.totalorder %v774, %v797
        %vm820 = vcmp.eq.s32.totalorder %v777, %v793
        %vm821 = vcmp.eq.s32.totalorder %v777, %v797
        %vm822 = vcmp.eq.s32.totalorder %v780, %v793
        %vm823 = vcmp.eq.s32.totalorder %v780, %v797
        %vm824 = vcmp.eq.s32.totalorder %v783, %v793
        %vm825 = vcmp.eq.s32.totalorder %v783, %v797
        %vm826 = vcmp.eq.s32.totalorder %v786, %v793
        %vm827 = vcmp.eq.s32.totalorder %v786, %v797
        %vm828 = vcmp.eq.s32.totalorder %v789, %v793
        %vm829 = vcmp.eq.s32.totalorder %v789, %v797
        %vm830 = vmand %vm710, %vm798
        %vm831 = vmand %vm711, %vm799
        %vm832 = vmand %vm712, %vm800
        %vm833 = vmand %vm713, %vm801
        %vm834 = vmand %vm714, %vm802
        %vm835 = vmand %vm715, %vm803
        %vm836 = vmand %vm716, %vm804
        %vm837 = vmand %vm717, %vm805
        %vm838 = vmand %vm718, %vm806
        %vm839 = vmand %vm719, %vm807
        %vm840 = vmand %vm720, %vm808
        %vm841 = vmand %vm721, %vm809
        %vm842 = vmand %vm722, %vm810
        %vm843 = vmand %vm723, %vm811
        %vm844 = vmand %vm724, %vm812
        %vm845 = vmand %vm725, %vm813
        %vm846 = vmand %vm726, %vm814
        %vm847 = vmand %vm727, %vm815
        %vm848 = vmand %vm728, %vm816
        %vm849 = vmand %vm729, %vm817
        %vm850 = vmand %vm730, %vm818
        %vm851 = vmand %vm731, %vm819
        %vm852 = vmand %vm732, %vm820
        %vm853 = vmand %vm733, %vm821
        %vm854 = vmand %vm734, %vm822
        %vm855 = vmand %vm735, %vm823
        %vm856 = vmand %vm736, %vm824
        %vm857 = vmand %vm737, %vm825
        %vm858 = vmand %vm738, %vm826
        %vm859 = vmand %vm739, %vm827
        %vm860 = vmand %vm740, %vm828
        %vm861 = vmand %vm741, %vm829
        %vm862 = vcmp.lt.s32.totalorder %v372, 0
        %v863 = vsub.s32 0, %v372
        %v864 = vsel %vm862, %v863, %v372
        %vm865 = vcmp.lt.s32.totalorder %v373, 0
        %v866 = vsub.s32 0, %v373
        %v867 = vsel %vm865, %v866, %v373
        %vm868 = vcmp.lt.s32.totalorder %v374, 0
        %v869 = vsub.s32 0, %v374
        %v870 = vsel %vm868, %v869, %v374
        %vm871 = vcmp.lt.s32.totalorder %v375, 0
        %v872 = vsub.s32 0, %v375
        %v873 = vsel %vm871, %v872, %v375
        %vm874 = vcmp.lt.s32.totalorder %v376, 0
        %v875 = vsub.s32 0, %v376
        %v876 = vsel %vm874, %v875, %v376
        %vm877 = vcmp.lt.s32.totalorder %v377, 0
        %v878 = vsub.s32 0, %v377
        %v879 = vsel %vm877, %v878, %v377
        %vm880 = vcmp.lt.s32.totalorder %v378, 0
        %v881 = vsub.s32 0, %v378
        %v882 = vsel %vm880, %v881, %v378
        %vm883 = vcmp.lt.s32.totalorder %v379, 0
        %v884 = vsub.s32 0, %v379
        %v885 = vsel %vm883, %v884, %v379
        %vm886 = vcmp.lt.s32.totalorder %v380, 0
        %v887 = vsub.s32 0, %v380
        %v888 = vsel %vm886, %v887, %v380
        %vm889 = vcmp.lt.s32.totalorder %v381, 0
        %v890 = vsub.s32 0, %v381
        %v891 = vsel %vm889, %v890, %v381
        %vm892 = vcmp.lt.s32.totalorder %v382, 0
        %v893 = vsub.s32 0, %v382
        %v894 = vsel %vm892, %v893, %v382
        %vm895 = vcmp.lt.s32.totalorder %v383, 0
        %v896 = vsub.s32 0, %v383
        %v897 = vsel %vm895, %v896, %v383
        %vm898 = vcmp.lt.s32.totalorder %v384, 0
        %v899 = vsub.s32 0, %v384
        %v900 = vsel %vm898, %v899, %v384
        %vm901 = vcmp.lt.s32.totalorder %v385, 0
        %v902 = vsub.s32 0, %v385
        %v903 = vsel %vm901, %v902, %v385
        %vm904 = vcmp.lt.s32.totalorder %v386, 0
        %v905 = vsub.s32 0, %v386
        %v906 = vsel %vm904, %v905, %v386
        %vm907 = vcmp.lt.s32.totalorder %v387, 0
        %v908 = vsub.s32 0, %v387
        %v909 = vsel %vm907, %v908, %v387
        %vm910 = vcmp.lt.s32.totalorder %v388, 0
        %v911 = vsub.s32 0, %v388
        %v912 = vsel %vm910, %v911, %v388
        %vm913 = vcmp.lt.s32.totalorder %v389, 0
        %v914 = vsub.s32 0, %v389
        %v915 = vsel %vm913, %v914, %v389
        %vm916 = vcmp.lt.s32.totalorder %v390, 0
        %v917 = vsub.s32 0, %v390
        %v918 = vsel %vm916, %v917, %v390
        %vm919 = vcmp.lt.s32.totalorder %v391, 0
        %v920 = vsub.s32 0, %v391
        %v921 = vsel %vm919, %v920, %v391
        %vm922 = vcmp.lt.s32.totalorder %v392, 0
        %v923 = vsub.s32 0, %v392
        %v924 = vsel %vm922, %v923, %v392
        %vm925 = vcmp.lt.s32.totalorder %v393, 0
        %v926 = vsub.s32 0, %v393
        %v927 = vsel %vm925, %v926, %v393
        %vm928 = vcmp.lt.s32.totalorder %v394, 0
        %v929 = vsub.s32 0, %v394
        %v930 = vsel %vm928, %v929, %v394
        %vm931 = vcmp.lt.s32.totalorder %v395, 0
        %v932 = vsub.s32 0, %v395
        %v933 = vsel %vm931, %v932, %v395
        %vm934 = vcmp.lt.s32.totalorder %v396, 0
        %v935 = vsub.s32 0, %v396
        %v936 = vsel %vm934, %v935, %v396
        %vm937 = vcmp.lt.s32.totalorder %v397, 0
        %v938 = vsub.s32 0, %v397
        %v939 = vsel %vm937, %v938, %v397
        %vm940 = vcmp.lt.s32.totalorder %v398, 0
        %v941 = vsub.s32 0, %v398
        %v942 = vsel %vm940, %v941, %v398
        %vm943 = vcmp.lt.s32.totalorder %v399, 0
        %v944 = vsub.s32 0, %v399
        %v945 = vsel %vm943, %v944, %v399
        %vm946 = vcmp.lt.s32.totalorder %v400, 0
        %v947 = vsub.s32 0, %v400
        %v948 = vsel %vm946, %v947, %v400
        %vm949 = vcmp.lt.s32.totalorder %v401, 0
        %v950 = vsub.s32 0, %v401
        %v951 = vsel %vm949, %v950, %v401
        %vm952 = vcmp.lt.s32.totalorder %v402, 0
        %v953 = vsub.s32 0, %v402
        %v954 = vsel %vm952, %v953, %v402
        %vm955 = vcmp.lt.s32.totalorder %v403, 0
        %v956 = vsub.s32 0, %v403
        %v957 = vsel %vm955, %v956, %v403
        %vm958 = vcmp.le.s32.totalorder %v864, 4
        %vm959 = vcmp.le.s32.totalorder %v867, 4
        %vm960 = vcmp.le.s32.totalorder %v870, 4
        %vm961 = vcmp.le.s32.totalorder %v873, 4
        %vm962 = vcmp.le.s32.totalorder %v876, 4
        %vm963 = vcmp.le.s32.totalorder %v879, 4
        %vm964 = vcmp.le.s32.totalorder %v882, 4
        %vm965 = vcmp.le.s32.totalorder %v885, 4
        %vm966 = vcmp.le.s32.totalorder %v888, 4
        %vm967 = vcmp.le.s32.totalorder %v891, 4
        %vm968 = vcmp.le.s32.totalorder %v894, 4
        %vm969 = vcmp.le.s32.totalorder %v897, 4
        %vm970 = vcmp.le.s32.totalorder %v900, 4
        %vm971 = vcmp.le.s32.totalorder %v903, 4
        %vm972 = vcmp.le.s32.totalorder %v906, 4
        %vm973 = vcmp.le.s32.totalorder %v909, 4
        %vm974 = vcmp.le.s32.totalorder %v912, 4
        %vm975 = vcmp.le.s32.totalorder %v915, 4
        %vm976 = vcmp.le.s32.totalorder %v918, 4
        %vm977 = vcmp.le.s32.totalorder %v921, 4
        %vm978 = vcmp.le.s32.totalorder %v924, 4
        %vm979 = vcmp.le.s32.totalorder %v927, 4
        %vm980 = vcmp.le.s32.totalorder %v930, 4
        %vm981 = vcmp.le.s32.totalorder %v933, 4
        %vm982 = vcmp.le.s32.totalorder %v936, 4
        %vm983 = vcmp.le.s32.totalorder %v939, 4
        %vm984 = vcmp.le.s32.totalorder %v942, 4
        %vm985 = vcmp.le.s32.totalorder %v945, 4
        %vm986 = vcmp.le.s32.totalorder %v948, 4
        %vm987 = vcmp.le.s32.totalorder %v951, 4
        %vm988 = vcmp.le.s32.totalorder %v954, 4
        %vm989 = vcmp.le.s32.totalorder %v957, 4
        %vm990 = vmand %vm830, %vm958
        %vm991 = vmand %vm831, %vm959
        %vm992 = vmand %vm832, %vm960
        %vm993 = vmand %vm833, %vm961
        %vm994 = vmand %vm834, %vm962
        %vm995 = vmand %vm835, %vm963
        %vm996 = vmand %vm836, %vm964
        %vm997 = vmand %vm837, %vm965
        %vm998 = vmand %vm838, %vm966
        %vm999 = vmand %vm839, %vm967
        %vm1000 = vmand %vm840, %vm968
        %vm1001 = vmand %vm841, %vm969
        %vm1002 = vmand %vm842, %vm970
        %vm1003 = vmand %vm843, %vm971
        %vm1004 = vmand %vm844, %vm972
        %vm1005 = vmand %vm845, %vm973
        %vm1006 = vmand %vm846, %vm974
        %vm1007 = vmand %vm847, %vm975
        %vm1008 = vmand %vm848, %vm976
        %vm1009 = vmand %vm849, %vm977
        %vm1010 = vmand %vm850, %vm978
        %vm1011 = vmand %vm851, %vm979
        %vm1012 = vmand %vm852, %vm980
        %vm1013 = vmand %vm853, %vm981
        %vm1014 = vmand %vm854, %vm982
        %vm1015 = vmand %vm855, %vm983
        %vm1016 = vmand %vm856, %vm984
        %vm1017 = vmand %vm857, %vm985
        %vm1018 = vmand %vm858, %vm986
        %vm1019 = vmand %vm859, %vm987
        %vm1020 = vmand %vm860, %vm988
        %vm1021 = vmand %vm861, %vm989
        %vm1022 = vcmp.lt.s32.totalorder %v460, 0
        %v1023 = vsub.s32 0, %v460
        %v1024 = vsel %vm1022, %v1023, %v460
        %vm1025 = vcmp.lt.s32.totalorder %v461, 0
        %v1026 = vsub.s32 0, %v461
        %v1027 = vsel %vm1025, %v1026, %v461
        %vm1028 = vcmp.lt.s32.totalorder %v462, 0
        %v1029 = vsub.s32 0, %v462
        %v1030 = vsel %vm1028, %v1029, %v462
        %vm1031 = vcmp.lt.s32.totalorder %v463, 0
        %v1032 = vsub.s32 0, %v463
        %v1033 = vsel %vm1031, %v1032, %v463
        %vm1034 = vcmp.lt.s32.totalorder %v464, 0
        %v1035 = vsub.s32 0, %v464
        %v1036 = vsel %vm1034, %v1035, %v464
        %vm1037 = vcmp.lt.s32.totalorder %v465, 0
        %v1038 = vsub.s32 0, %v465
        %v1039 = vsel %vm1037, %v1038, %v465
        %vm1040 = vcmp.lt.s32.totalorder %v466, 0
        %v1041 = vsub.s32 0, %v466
        %v1042 = vsel %vm1040, %v1041, %v466
        %vm1043 = vcmp.lt.s32.totalorder %v467, 0
        %v1044 = vsub.s32 0, %v467
        %v1045 = vsel %vm1043, %v1044, %v467
        %vm1046 = vcmp.lt.s32.totalorder %v468, 0
        %v1047 = vsub.s32 0, %v468
        %v1048 = vsel %vm1046, %v1047, %v468
        %vm1049 = vcmp.lt.s32.totalorder %v469, 0
        %v1050 = vsub.s32 0, %v469
        %v1051 = vsel %vm1049, %v1050, %v469
        %vm1052 = vcmp.lt.s32.totalorder %v470, 0
        %v1053 = vsub.s32 0, %v470
        %v1054 = vsel %vm1052, %v1053, %v470
        %vm1055 = vcmp.lt.s32.totalorder %v471, 0
        %v1056 = vsub.s32 0, %v471
        %v1057 = vsel %vm1055, %v1056, %v471
        %vm1058 = vcmp.lt.s32.totalorder %v472, 0
        %v1059 = vsub.s32 0, %v472
        %v1060 = vsel %vm1058, %v1059, %v472
        %vm1061 = vcmp.lt.s32.totalorder %v473, 0
        %v1062 = vsub.s32 0, %v473
        %v1063 = vsel %vm1061, %v1062, %v473
        %vm1064 = vcmp.lt.s32.totalorder %v474, 0
        %v1065 = vsub.s32 0, %v474
        %v1066 = vsel %vm1064, %v1065, %v474
        %vm1067 = vcmp.lt.s32.totalorder %v475, 0
        %v1068 = vsub.s32 0, %v475
        %v1069 = vsel %vm1067, %v1068, %v475
        %vm1070 = vcmp.lt.s32.totalorder %v476, 0
        %v1071 = vsub.s32 0, %v476
        %v1072 = vsel %vm1070, %v1071, %v476
        %vm1073 = vcmp.lt.s32.totalorder %v477, 0
        %v1074 = vsub.s32 0, %v477
        %v1075 = vsel %vm1073, %v1074, %v477
        %vm1076 = vcmp.lt.s32.totalorder %v478, 0
        %v1077 = vsub.s32 0, %v478
        %v1078 = vsel %vm1076, %v1077, %v478
        %vm1079 = vcmp.lt.s32.totalorder %v479, 0
        %v1080 = vsub.s32 0, %v479
        %v1081 = vsel %vm1079, %v1080, %v479
        %vm1082 = vcmp.lt.s32.totalorder %v480, 0
        %v1083 = vsub.s32 0, %v480
        %v1084 = vsel %vm1082, %v1083, %v480
        %vm1085 = vcmp.lt.s32.totalorder %v481, 0
        %v1086 = vsub.s32 0, %v481
        %v1087 = vsel %vm1085, %v1086, %v481
        %vm1088 = vcmp.lt.s32.totalorder %v482, 0
        %v1089 = vsub.s32 0, %v482
        %v1090 = vsel %vm1088, %v1089, %v482
        %vm1091 = vcmp.lt.s32.totalorder %v483, 0
        %v1092 = vsub.s32 0, %v483
        %v1093 = vsel %vm1091, %v1092, %v483
        %vm1094 = vcmp.lt.s32.totalorder %v484, 0
        %v1095 = vsub.s32 0, %v484
        %v1096 = vsel %vm1094, %v1095, %v484
        %vm1097 = vcmp.lt.s32.totalorder %v485, 0
        %v1098 = vsub.s32 0, %v485
        %v1099 = vsel %vm1097, %v1098, %v485
        %vm1100 = vcmp.lt.s32.totalorder %v486, 0
        %v1101 = vsub.s32 0, %v486
        %v1102 = vsel %vm1100, %v1101, %v486
        %vm1103 = vcmp.lt.s32.totalorder %v487, 0
        %v1104 = vsub.s32 0, %v487
        %v1105 = vsel %vm1103, %v1104, %v487
        %vm1106 = vcmp.lt.s32.totalorder %v488, 0
        %v1107 = vsub.s32 0, %v488
        %v1108 = vsel %vm1106, %v1107, %v488
        %vm1109 = vcmp.lt.s32.totalorder %v489, 0
        %v1110 = vsub.s32 0, %v489
        %v1111 = vsel %vm1109, %v1110, %v489
        %vm1112 = vcmp.lt.s32.totalorder %v490, 0
        %v1113 = vsub.s32 0, %v490
        %v1114 = vsel %vm1112, %v1113, %v490
        %vm1115 = vcmp.lt.s32.totalorder %v491, 0
        %v1116 = vsub.s32 0, %v491
        %v1117 = vsel %vm1115, %v1116, %v491
        %vm1118 = vcmp.le.s32.totalorder %v1024, 4
        %vm1119 = vcmp.le.s32.totalorder %v1027, 4
        %vm1120 = vcmp.le.s32.totalorder %v1030, 4
        %vm1121 = vcmp.le.s32.totalorder %v1033, 4
        %vm1122 = vcmp.le.s32.totalorder %v1036, 4
        %vm1123 = vcmp.le.s32.totalorder %v1039, 4
        %vm1124 = vcmp.le.s32.totalorder %v1042, 4
        %vm1125 = vcmp.le.s32.totalorder %v1045, 4
        %vm1126 = vcmp.le.s32.totalorder %v1048, 4
        %vm1127 = vcmp.le.s32.totalorder %v1051, 4
        %vm1128 = vcmp.le.s32.totalorder %v1054, 4
        %vm1129 = vcmp.le.s32.totalorder %v1057, 4
        %vm1130 = vcmp.le.s32.totalorder %v1060, 4
        %vm1131 = vcmp.le.s32.totalorder %v1063, 4
        %vm1132 = vcmp.le.s32.totalorder %v1066, 4
        %vm1133 = vcmp.le.s32.totalorder %v1069, 4
        %vm1134 = vcmp.le.s32.totalorder %v1072, 4
        %vm1135 = vcmp.le.s32.totalorder %v1075, 4
        %vm1136 = vcmp.le.s32.totalorder %v1078, 4
        %vm1137 = vcmp.le.s32.totalorder %v1081, 4
        %vm1138 = vcmp.le.s32.totalorder %v1084, 4
        %vm1139 = vcmp.le.s32.totalorder %v1087, 4
        %vm1140 = vcmp.le.s32.totalorder %v1090, 4
        %vm1141 = vcmp.le.s32.totalorder %v1093, 4
        %vm1142 = vcmp.le.s32.totalorder %v1096, 4
        %vm1143 = vcmp.le.s32.totalorder %v1099, 4
        %vm1144 = vcmp.le.s32.totalorder %v1102, 4
        %vm1145 = vcmp.le.s32.totalorder %v1105, 4
        %vm1146 = vcmp.le.s32.totalorder %v1108, 4
        %vm1147 = vcmp.le.s32.totalorder %v1111, 4
        %vm1148 = vcmp.le.s32.totalorder %v1114, 4
        %vm1149 = vcmp.le.s32.totalorder %v1117, 4
        %vm1150 = vmand %vm990, %vm1118
        %vm1151 = vmand %vm991, %vm1119
        %vm1152 = vmand %vm992, %vm1120
        %vm1153 = vmand %vm993, %vm1121
        %vm1154 = vmand %vm994, %vm1122
        %vm1155 = vmand %vm995, %vm1123
        %vm1156 = vmand %vm996, %vm1124
        %vm1157 = vmand %vm997, %vm1125
        %vm1158 = vmand %vm998, %vm1126
        %vm1159 = vmand %vm999, %vm1127
        %vm1160 = vmand %vm1000, %vm1128
        %vm1161 = vmand %vm1001, %vm1129
        %vm1162 = vmand %vm1002, %vm1130
        %vm1163 = vmand %vm1003, %vm1131
        %vm1164 = vmand %vm1004, %vm1132
        %vm1165 = vmand %vm1005, %vm1133
        %vm1166 = vmand %vm1006, %vm1134
        %vm1167 = vmand %vm1007, %vm1135
        %vm1168 = vmand %vm1008, %vm1136
        %vm1169 = vmand %vm1009, %vm1137
        %vm1170 = vmand %vm1010, %vm1138
        %vm1171 = vmand %vm1011, %vm1139
        %vm1172 = vmand %vm1012, %vm1140
        %vm1173 = vmand %vm1013, %vm1141
        %vm1174 = vmand %vm1014, %vm1142
        %vm1175 = vmand %vm1015, %vm1143
        %vm1176 = vmand %vm1016, %vm1144
        %vm1177 = vmand %vm1017, %vm1145
        %vm1178 = vmand %vm1018, %vm1146
        %vm1179 = vmand %vm1019, %vm1147
        %vm1180 = vmand %vm1020, %vm1148
        %vm1181 = vmand %vm1021, %vm1149
        %vm1182 = vcmp.ge.s32.totalorder %v548, 0
        %vm1183 = vcmp.ge.s32.totalorder %v549, 0
        %vm1184 = vcmp.ge.s32.totalorder %v550, 0
        %vm1185 = vcmp.ge.s32.totalorder %v551, 0
        %vm1186 = vcmp.ge.s32.totalorder %v552, 0
        %vm1187 = vcmp.ge.s32.totalorder %v553, 0
        %vm1188 = vcmp.ge.s32.totalorder %v554, 0
        %vm1189 = vcmp.ge.s32.totalorder %v555, 0
        %vm1190 = vcmp.ge.s32.totalorder %v556, 0
        %vm1191 = vcmp.ge.s32.totalorder %v557, 0
        %vm1192 = vcmp.ge.s32.totalorder %v558, 0
        %vm1193 = vcmp.ge.s32.totalorder %v559, 0
        %vm1194 = vcmp.ge.s32.totalorder %v560, 0
        %vm1195 = vcmp.ge.s32.totalorder %v561, 0
        %vm1196 = vcmp.ge.s32.totalorder %v562, 0
        %vm1197 = vcmp.ge.s32.totalorder %v563, 0
        %vm1198 = vcmp.ge.s32.totalorder %v564, 0
        %vm1199 = vcmp.ge.s32.totalorder %v565, 0
        %vm1200 = vcmp.ge.s32.totalorder %v566, 0
        %vm1201 = vcmp.ge.s32.totalorder %v567, 0
        %vm1202 = vcmp.ge.s32.totalorder %v568, 0
        %vm1203 = vcmp.ge.s32.totalorder %v569, 0
        %vm1204 = vcmp.ge.s32.totalorder %v570, 0
        %vm1205 = vcmp.ge.s32.totalorder %v571, 0
        %vm1206 = vcmp.ge.s32.totalorder %v572, 0
        %vm1207 = vcmp.ge.s32.totalorder %v573, 0
        %vm1208 = vcmp.ge.s32.totalorder %v574, 0
        %vm1209 = vcmp.ge.s32.totalorder %v575, 0
        %vm1210 = vcmp.ge.s32.totalorder %v576, 0
        %vm1211 = vcmp.ge.s32.totalorder %v577, 0
        %vm1212 = vcmp.ge.s32.totalorder %v578, 0
        %vm1213 = vcmp.ge.s32.totalorder %v579, 0
        %vm1214 = vmand %vm1150, %vm1182
        %vm1215 = vmand %vm1151, %vm1183
        %vm1216 = vmand %vm1152, %vm1184
        %vm1217 = vmand %vm1153, %vm1185
        %vm1218 = vmand %vm1154, %vm1186
        %vm1219 = vmand %vm1155, %vm1187
        %vm1220 = vmand %vm1156, %vm1188
        %vm1221 = vmand %vm1157, %vm1189
        %vm1222 = vmand %vm1158, %vm1190
        %vm1223 = vmand %vm1159, %vm1191
        %vm1224 = vmand %vm1160, %vm1192
        %vm1225 = vmand %vm1161, %vm1193
        %vm1226 = vmand %vm1162, %vm1194
        %vm1227 = vmand %vm1163, %vm1195
        %vm1228 = vmand %vm1164, %vm1196
        %vm1229 = vmand %vm1165, %vm1197
        %vm1230 = vmand %vm1166, %vm1198
        %vm1231 = vmand %vm1167, %vm1199
        %vm1232 = vmand %vm1168, %vm1200
        %vm1233 = vmand %vm1169, %vm1201
        %vm1234 = vmand %vm1170, %vm1202
        %vm1235 = vmand %vm1171, %vm1203
        %vm1236 = vmand %vm1172, %vm1204
        %vm1237 = vmand %vm1173, %vm1205
        %vm1238 = vmand %vm1174, %vm1206
        %vm1239 = vmand %vm1175, %vm1207
        %vm1240 = vmand %vm1176, %vm1208
        %vm1241 = vmand %vm1177, %vm1209
        %vm1242 = vmand %vm1178, %vm1210
        %vm1243 = vmand %vm1179, %vm1211
        %vm1244 = vmand %vm1180, %vm1212
        %vm1245 = vmand %vm1181, %vm1213
        %vm1246 = vcmp.le.s32.totalorder %v548, 50000
        %vm1247 = vcmp.le.s32.totalorder %v549, 50000
        %vm1248 = vcmp.le.s32.totalorder %v550, 50000
        %vm1249 = vcmp.le.s32.totalorder %v551, 50000
        %vm1250 = vcmp.le.s32.totalorder %v552, 50000
        %vm1251 = vcmp.le.s32.totalorder %v553, 50000
        %vm1252 = vcmp.le.s32.totalorder %v554, 50000
        %vm1253 = vcmp.le.s32.totalorder %v555, 50000
        %vm1254 = vcmp.le.s32.totalorder %v556, 50000
        %vm1255 = vcmp.le.s32.totalorder %v557, 50000
        %vm1256 = vcmp.le.s32.totalorder %v558, 50000
        %vm1257 = vcmp.le.s32.totalorder %v559, 50000
        %vm1258 = vcmp.le.s32.totalorder %v560, 50000
        %vm1259 = vcmp.le.s32.totalorder %v561, 50000
        %vm1260 = vcmp.le.s32.totalorder %v562, 50000
        %vm1261 = vcmp.le.s32.totalorder %v563, 50000
        %vm1262 = vcmp.le.s32.totalorder %v564, 50000
        %vm1263 = vcmp.le.s32.totalorder %v565, 50000
        %vm1264 = vcmp.le.s32.totalorder %v566, 50000
        %vm1265 = vcmp.le.s32.totalorder %v567, 50000
        %vm1266 = vcmp.le.s32.totalorder %v568, 50000
        %vm1267 = vcmp.le.s32.totalorder %v569, 50000
        %vm1268 = vcmp.le.s32.totalorder %v570, 50000
        %vm1269 = vcmp.le.s32.totalorder %v571, 50000
        %vm1270 = vcmp.le.s32.totalorder %v572, 50000
        %vm1271 = vcmp.le.s32.totalorder %v573, 50000
        %vm1272 = vcmp.le.s32.totalorder %v574, 50000
        %vm1273 = vcmp.le.s32.totalorder %v575, 50000
        %vm1274 = vcmp.le.s32.totalorder %v576, 50000
        %vm1275 = vcmp.le.s32.totalorder %v577, 50000
        %vm1276 = vcmp.le.s32.totalorder %v578, 50000
        %vm1277 = vcmp.le.s32.totalorder %v579, 50000
        %vm1278 = vmand %vm1214, %vm1246
        %vm1279 = vmand %vm1215, %vm1247
        %vm1280 = vmand %vm1216, %vm1248
        %vm1281 = vmand %vm1217, %vm1249
        %vm1282 = vmand %vm1218, %vm1250
        %vm1283 = vmand %vm1219, %vm1251
        %vm1284 = vmand %vm1220, %vm1252
        %vm1285 = vmand %vm1221, %vm1253
        %vm1286 = vmand %vm1222, %vm1254
        %vm1287 = vmand %vm1223, %vm1255
        %vm1288 = vmand %vm1224, %vm1256
        %vm1289 = vmand %vm1225, %vm1257
        %vm1290 = vmand %vm1226, %vm1258
        %vm1291 = vmand %vm1227, %vm1259
        %vm1292 = vmand %vm1228, %vm1260
        %vm1293 = vmand %vm1229, %vm1261
        %vm1294 = vmand %vm1230, %vm1262
        %vm1295 = vmand %vm1231, %vm1263
        %vm1296 = vmand %vm1232, %vm1264
        %vm1297 = vmand %vm1233, %vm1265
        %vm1298 = vmand %vm1234, %vm1266
        %vm1299 = vmand %vm1235, %vm1267
        %vm1300 = vmand %vm1236, %vm1268
        %vm1301 = vmand %vm1237, %vm1269
        %vm1302 = vmand %vm1238, %vm1270
        %vm1303 = vmand %vm1239, %vm1271
        %vm1304 = vmand %vm1240, %vm1272
        %vm1305 = vmand %vm1241, %vm1273
        %vm1306 = vmand %vm1242, %vm1274
        %vm1307 = vmand %vm1243, %vm1275
        %vm1308 = vmand %vm1244, %vm1276
        %vm1309 = vmand %vm1245, %vm1277
        %v1310 = vsel %vm1278, 1, 0
        %v1311 = vsel %vm1279, 1, 0
        %v1312 = vsel %vm1280, 1, 0
        %v1313 = vsel %vm1281, 1, 0
        %v1314 = vsel %vm1282, 1, 0
        %v1315 = vsel %vm1283, 1, 0
        %v1316 = vsel %vm1284, 1, 0
        %v1317 = vsel %vm1285, 1, 0
        %v1318 = vsel %vm1286, 1, 0
        %v1319 = vsel %vm1287, 1, 0
        %v1320 = vsel %vm1288, 1, 0
        %v1321 = vsel %vm1289, 1, 0
        %v1322 = vsel %vm1290, 1, 0
        %v1323 = vsel %vm1291, 1, 0
        %v1324 = vsel %vm1292, 1, 0
        %v1325 = vsel %vm1293, 1, 0
        %v1326 = vsel %vm1294, 1, 0
        %v1327 = vsel %vm1295, 1, 0
        %v1328 = vsel %vm1296, 1, 0
        %v1329 = vsel %vm1297, 1, 0
        %v1330 = vsel %vm1298, 1, 0
        %v1331 = vsel %vm1299, 1, 0
        %v1332 = vsel %vm1300, 1, 0
        %v1333 = vsel %vm1301, 1, 0
        %v1334 = vsel %vm1302, 1, 0
        %v1335 = vsel %vm1303, 1, 0
        %v1336 = vsel %vm1304, 1, 0
        %v1337 = vsel %vm1305, 1, 0
        %v1338 = vsel %vm1306, 1, 0
        %v1339 = vsel %vm1307, 1, 0
        %v1340 = vsel %vm1308, 1, 0
        %v1341 = vsel %vm1309, 1, 0
        %v1342 = vcvt.s32.f32 %v1310
        %v1343 = vcvt.s32.f32 %v1311
        %v1344 = vcvt.s32.f32 %v1312
        %v1345 = vcvt.s32.f32 %v1313
        %v1346 = vcvt.s32.f32 %v1314
        %v1347 = vcvt.s32.f32 %v1315
        %v1348 = vcvt.s32.f32 %v1316
        %v1349 = vcvt.s32.f32 %v1317
        %v1350 = vcvt.s32.f32 %v1318
        %v1351 = vcvt.s32.f32 %v1319
        %v1352 = vcvt.s32.f32 %v1320
        %v1353 = vcvt.s32.f32 %v1321
        %v1354 = vcvt.s32.f32 %v1322
        %v1355 = vcvt.s32.f32 %v1323
        %v1356 = vcvt.s32.f32 %v1324
        %v1357 = vcvt.s32.f32 %v1325
        %v1358 = vcvt.s32.f32 %v1326
        %v1359 = vcvt.s32.f32 %v1327
        %v1360 = vcvt.s32.f32 %v1328
        %v1361 = vcvt.s32.f32 %v1329
        %v1362 = vcvt.s32.f32 %v1330
        %v1363 = vcvt.s32.f32 %v1331
        %v1364 = vcvt.s32.f32 %v1332
        %v1365 = vcvt.s32.f32 %v1333
        %v1366 = vcvt.s32.f32 %v1334
        %v1367 = vcvt.s32.f32 %v1335
        %v1368 = vcvt.s32.f32 %v1336
        %v1369 = vcvt.s32.f32 %v1337
        %v1370 = vcvt.s32.f32 %v1338
        %v1371 = vcvt.s32.f32 %v1339
        %v1372 = vcvt.s32.f32 %v1340
        %v1373 = vcvt.s32.f32 %v1341
        %v1374 = vpack.c.bf16 %v1344, %v1342
        %v1375 = vpack.c.bf16 %v1345, %v1343
        %v1376 = vpack.c.bf16 %v1348, %v1346
        %v1377 = vpack.c.bf16 %v1349, %v1347
        %v1378 = vpack.c.bf16 %v1352, %v1350
        %v1379 = vpack.c.bf16 %v1353, %v1351
        %v1380 = vpack.c.bf16 %v1356, %v1354
        %v1381 = vpack.c.bf16 %v1357, %v1355
        %v1382 = vpack.c.bf16 %v1360, %v1358
        %v1383 = vpack.c.bf16 %v1361, %v1359
        %v1384 = vpack.c.bf16 %v1364, %v1362
        %v1385 = vpack.c.bf16 %v1365, %v1363
        %v1386 = vpack.c.bf16 %v1368, %v1366
        %v1387 = vpack.c.bf16 %v1369, %v1367
        %v1388 = vpack.c.bf16 %v1372, %v1370
        %v1389 = vpack.c.bf16 %v1373, %v1371
        %v1390 = vld [vmem:[%s3] sm:$0xff]
        %v1391 = vld [vmem:[%s3 + $0x8] sm:$0xff]
        %v1392 = vld [vmem:[%s3 + $0x10] sm:$0xff]
        %v1393 = vld [vmem:[%s3 + $0x18] sm:$0xff]
        %v1394 = vld [vmem:[%s3 + $0x20] sm:$0xff]
        %v1395 = vld [vmem:[%s3 + $0x28] sm:$0xff]
        %v1396 = vld [vmem:[%s3 + $0x30] sm:$0xff]
        %v1397 = vld [vmem:[%s3 + $0x38] sm:$0xff]
        %v1398 = vld [vmem:[%s3 + $0x40] sm:$0xff]
        %v1399 = vld [vmem:[%s3 + $0x48] sm:$0xff]
        %v1400 = vld [vmem:[%s3 + $0x50] sm:$0xff]
        %v1401 = vld [vmem:[%s3 + $0x58] sm:$0xff]
        %v1402 = vld [vmem:[%s3 + $0x60] sm:$0xff]
        %v1403 = vld [vmem:[%s3 + $0x68] sm:$0xff]
        %v1404 = vld [vmem:[%s3 + $0x70] sm:$0xff]
        %v1405 = vld [vmem:[%s3 + $0x78] sm:$0xff]
        %v1406 = vld [vmem:[%s3 + $0x80] sm:$0xff]
        %v1407 = vld [vmem:[%s3 + $0x88] sm:$0xff]
        %v1408 = vld [vmem:[%s3 + $0x90] sm:$0xff]
        %v1409 = vld [vmem:[%s3 + $0x98] sm:$0xff]
        %v1410 = vld [vmem:[%s3 + $0xa0] sm:$0xff]
        %v1411 = vld [vmem:[%s3 + $0xa8] sm:$0xff]
        %v1412 = vld [vmem:[%s3 + $0xb0] sm:$0xff]
        %v1413 = vld [vmem:[%s3 + $0xb8] sm:$0xff]
        %v1414 = vld [vmem:[%s3 + $0xc0] sm:$0xff]
        %v1415 = vld [vmem:[%s3 + $0xc8] sm:$0xff]
        %v1416 = vld [vmem:[%s3 + $0xd0] sm:$0xff]
        %v1417 = vld [vmem:[%s3 + $0xd8] sm:$0xff]
        %v1418 = vld [vmem:[%s3 + $0xe0] sm:$0xff]
        %v1419 = vld [vmem:[%s3 + $0xe8] sm:$0xff]
        %v1420 = vld [vmem:[%s3 + $0xf0] sm:$0xff]
        %v1421 = vld [vmem:[%s3 + $0xf8] sm:$0xff]
        %v1454 = vunpack.c.l.b16 %v1390
        %v1455 = vunpack.c.h.b16 %v1390
        %v1456 = vunpack.c.l.b16 %v1391
        %v1457 = vunpack.c.h.b16 %v1391
        %v1458 = vunpack.c.l.b16 %v1392
        %v1459 = vunpack.c.h.b16 %v1392
        %v1460 = vunpack.c.l.b16 %v1393
        %v1461 = vunpack.c.h.b16 %v1393
        %v1462 = vunpack.c.l.b16 %v1394
        %v1463 = vunpack.c.h.b16 %v1394
        %v1464 = vunpack.c.l.b16 %v1395
        %v1465 = vunpack.c.h.b16 %v1395
        %v1466 = vunpack.c.l.b16 %v1396
        %v1467 = vunpack.c.h.b16 %v1396
        %v1468 = vunpack.c.l.b16 %v1397
        %v1469 = vunpack.c.h.b16 %v1397
        %v1470 = vunpack.c.l.b16 %v1398
        %v1471 = vunpack.c.h.b16 %v1398
        %v1472 = vunpack.c.l.b16 %v1399
        %v1473 = vunpack.c.h.b16 %v1399
        %v1474 = vunpack.c.l.b16 %v1400
        %v1475 = vunpack.c.h.b16 %v1400
        %v1476 = vunpack.c.l.b16 %v1401
        %v1477 = vunpack.c.h.b16 %v1401
        %v1478 = vunpack.c.l.b16 %v1402
        %v1479 = vunpack.c.h.b16 %v1402
        %v1480 = vunpack.c.l.b16 %v1403
        %v1481 = vunpack.c.h.b16 %v1403
        %v1482 = vunpack.c.l.b16 %v1404
        %v1483 = vunpack.c.h.b16 %v1404
        %v1484 = vunpack.c.l.b16 %v1405
        %v1485 = vunpack.c.h.b16 %v1405
        %v1486 = vunpack.c.l.b16 %v1406
        %v1487 = vunpack.c.h.b16 %v1406
        %v1488 = vunpack.c.l.b16 %v1407
        %v1489 = vunpack.c.h.b16 %v1407
        %v1490 = vunpack.c.l.b16 %v1408
        %v1491 = vunpack.c.h.b16 %v1408
        %v1492 = vunpack.c.l.b16 %v1409
        %v1493 = vunpack.c.h.b16 %v1409
        %v1494 = vunpack.c.l.b16 %v1410
        %v1495 = vunpack.c.h.b16 %v1410
        %v1496 = vunpack.c.l.b16 %v1411
        %v1497 = vunpack.c.h.b16 %v1411
        %v1498 = vunpack.c.l.b16 %v1412
        %v1499 = vunpack.c.h.b16 %v1412
        %v1500 = vunpack.c.l.b16 %v1413
        %v1501 = vunpack.c.h.b16 %v1413
        %v1502 = vunpack.c.l.b16 %v1414
        %v1503 = vunpack.c.h.b16 %v1414
        %v1504 = vunpack.c.l.b16 %v1415
        %v1505 = vunpack.c.h.b16 %v1415
        %v1506 = vunpack.c.l.b16 %v1416
        %v1507 = vunpack.c.h.b16 %v1416
        %v1508 = vunpack.c.l.b16 %v1417
        %v1509 = vunpack.c.h.b16 %v1417
        %v1510 = vunpack.c.l.b16 %v1418
        %v1511 = vunpack.c.h.b16 %v1418
        %v1512 = vunpack.c.l.b16 %v1419
        %v1513 = vunpack.c.h.b16 %v1419
        %v1514 = vunpack.c.l.b16 %v1420
        %v1515 = vunpack.c.h.b16 %v1420
        %v1516 = vunpack.c.l.b16 %v1421
        %v1517 = vunpack.c.h.b16 %v1421
        %v1518 = vpack.c.b16 %v1456, %v1454
        %v1519 = vpack.c.b16 %v1457, %v1455
        %v1520 = vpack.c.b16 %v1460, %v1458
        %v1521 = vpack.c.b16 %v1461, %v1459
        %v1522 = vpack.c.b16 %v1464, %v1462
        %v1523 = vpack.c.b16 %v1465, %v1463
        %v1524 = vpack.c.b16 %v1468, %v1466
        %v1525 = vpack.c.b16 %v1469, %v1467
        %v1526 = vpack.c.b16 %v1472, %v1470
        %v1527 = vpack.c.b16 %v1473, %v1471
        %v1528 = vpack.c.b16 %v1476, %v1474
        %v1529 = vpack.c.b16 %v1477, %v1475
        %v1530 = vpack.c.b16 %v1480, %v1478
        %v1531 = vpack.c.b16 %v1481, %v1479
        %v1532 = vpack.c.b16 %v1484, %v1482
        %v1533 = vpack.c.b16 %v1485, %v1483
        %v1534 = vpack.c.b16 %v1488, %v1486
        %v1535 = vpack.c.b16 %v1489, %v1487
        %v1536 = vpack.c.b16 %v1492, %v1490
        %v1537 = vpack.c.b16 %v1493, %v1491
        %v1538 = vpack.c.b16 %v1496, %v1494
        %v1539 = vpack.c.b16 %v1497, %v1495
        %v1540 = vpack.c.b16 %v1500, %v1498
        %v1541 = vpack.c.b16 %v1501, %v1499
        %v1542 = vpack.c.b16 %v1504, %v1502
        %v1543 = vpack.c.b16 %v1505, %v1503
        %v1544 = vpack.c.b16 %v1508, %v1506
        %v1545 = vpack.c.b16 %v1509, %v1507
        %v1546 = vpack.c.b16 %v1512, %v1510
        %v1547 = vpack.c.b16 %v1513, %v1511
        %v1548 = vpack.c.b16 %v1516, %v1514
        %v1549 = vpack.c.b16 %v1517, %v1515
        %1582 = vmatprep.subr.bf16.mxu0 %v1519
        %1583 = vmatpush1.bf16.msra.mxu0 %v1518
        %1584 = vmatprep.subr.bf16.mxu0 %v1521
        %1585 = vmatpush1.bf16.msra.mxu0 %v1520
        %1586 = vmatprep.subr.bf16.mxu0 %v1523
        %1587 = vmatpush1.bf16.msra.mxu0 %v1522
        %1588 = vmatprep.subr.bf16.mxu0 %v1525
        %1589 = vmatpush1.bf16.msra.mxu0 %v1524
        %1590 = vmatprep.subr.bf16.mxu0 %v1527
        %1591 = vmatpush1.bf16.msra.mxu0 %v1526
        %1592 = vmatprep.subr.bf16.mxu0 %v1529
        %1593 = vmatpush1.bf16.msra.mxu0 %v1528
        %1594 = vmatprep.subr.bf16.mxu0 %v1531
        %1595 = vmatpush1.bf16.msra.mxu0 %v1530
        %1596 = vmatprep.subr.bf16.mxu0 %v1533
        %1597 = vmatpush1.bf16.msra.mxu0 %v1532
        %1598 = vmatprep.subr.bf16.mxu0 %v1535
        %1599 = vmatpush1.bf16.msra.mxu0 %v1534
        %1600 = vmatprep.subr.bf16.mxu0 %v1537
        %1601 = vmatpush1.bf16.msra.mxu0 %v1536
        %1602 = vmatprep.subr.bf16.mxu0 %v1539
        %1603 = vmatpush1.bf16.msra.mxu0 %v1538
        %1604 = vmatprep.subr.bf16.mxu0 %v1541
        %1605 = vmatpush1.bf16.msra.mxu0 %v1540
        %1606 = vmatprep.subr.bf16.mxu0 %v1543
        %1607 = vmatpush1.bf16.msra.mxu0 %v1542
        %1608 = vmatprep.subr.bf16.mxu0 %v1545
        %1609 = vmatpush1.bf16.msra.mxu0 %v1544
        %1610 = vmatprep.subr.bf16.mxu0 %v1547
        %1611 = vmatpush1.bf16.msra.mxu0 %v1546
        %1612 = vmatprep.subr.bf16.mxu0 %v1549
        %1613 = vmatpush1.bf16.msra.mxu0 %v1548
        %1614 = vmatprep.mubr.bf16.mxu0 %v1375
        %1615 = vmatmul.mubr.bf16.gmra.mrb[0].mxu0 %v1374
        %v1616 = vpop.f32.mrb[0].mxu0
        %v1617 = vadd.f32 0.0, %v1616
        %v1618 = vpop.f32.mrb[0].mxu0
        %v1619 = vadd.f32 0.0, %v1618
        %v1620 = vpop.f32.mrb[0].mxu0
        %v1621 = vadd.f32 0.0, %v1620
        %v1622 = vpop.f32.mrb[0].mxu0
        %v1623 = vadd.f32 0.0, %v1622
        %1624 = vmatprep.mubr.bf16.mxu0 %v1377
        %1625 = vmatmul.mubr.bf16.gmra.mrb[0].mxu0 %v1376
        %v1626 = vpop.f32.mrb[0].mxu0
        %v1627 = vadd.f32 0.0, %v1626
        %v1628 = vpop.f32.mrb[0].mxu0
        %v1629 = vadd.f32 0.0, %v1628
        %v1630 = vpop.f32.mrb[0].mxu0
        %v1631 = vadd.f32 0.0, %v1630
        %v1632 = vpop.f32.mrb[0].mxu0
        %v1633 = vadd.f32 0.0, %v1632
        %1634 = vmatprep.mubr.bf16.mxu0 %v1379
        %1635 = vmatmul.mubr.bf16.gmra.mrb[0].mxu0 %v1378
        %v1636 = vpop.f32.mrb[0].mxu0
        %v1637 = vadd.f32 0.0, %v1636
        %v1638 = vpop.f32.mrb[0].mxu0
        %v1639 = vadd.f32 0.0, %v1638
        %v1640 = vpop.f32.mrb[0].mxu0
        %v1641 = vadd.f32 0.0, %v1640
        %v1642 = vpop.f32.mrb[0].mxu0
        %v1643 = vadd.f32 0.0, %v1642
        %1644 = vmatprep.mubr.bf16.mxu0 %v1381
        %1645 = vmatmul.mubr.bf16.gmra.mrb[0].mxu0 %v1380
        %v1646 = vpop.f32.mrb[0].mxu0
        %v1647 = vadd.f32 0.0, %v1646
        %v1648 = vpop.f32.mrb[0].mxu0
        %v1649 = vadd.f32 0.0, %v1648
        %v1650 = vpop.f32.mrb[0].mxu0
        %v1651 = vadd.f32 0.0, %v1650
        %v1652 = vpop.f32.mrb[0].mxu0
        %v1653 = vadd.f32 0.0, %v1652
        %1654 = vmatprep.mubr.bf16.mxu0 %v1383
        %1655 = vmatmul.mubr.bf16.gmra.mrb[0].mxu0 %v1382
        %v1656 = vpop.f32.mrb[0].mxu0
        %v1657 = vadd.f32 0.0, %v1656
        %v1658 = vpop.f32.mrb[0].mxu0
        %v1659 = vadd.f32 0.0, %v1658
        %v1660 = vpop.f32.mrb[0].mxu0
        %v1661 = vadd.f32 0.0, %v1660
        %v1662 = vpop.f32.mrb[0].mxu0
        %v1663 = vadd.f32 0.0, %v1662
        %1664 = vmatprep.mubr.bf16.mxu0 %v1385
        %1665 = vmatmul.mubr.bf16.gmra.mrb[0].mxu0 %v1384
        %v1666 = vpop.f32.mrb[0].mxu0
        %v1667 = vadd.f32 0.0, %v1666
        %v1668 = vpop.f32.mrb[0].mxu0
        %v1669 = vadd.f32 0.0, %v1668
        %v1670 = vpop.f32.mrb[0].mxu0
        %v1671 = vadd.f32 0.0, %v1670
        %v1672 = vpop.f32.mrb[0].mxu0
        %v1673 = vadd.f32 0.0, %v1672
        %1674 = vmatprep.mubr.bf16.mxu0 %v1387
        %1675 = vmatmul.mubr.bf16.gmra.mrb[0].mxu0 %v1386
        %v1676 = vpop.f32.mrb[0].mxu0
        %v1677 = vadd.f32 0.0, %v1676
        %v1678 = vpop.f32.mrb[0].mxu0
        %v1679 = vadd.f32 0.0, %v1678
        %v1680 = vpop.f32.mrb[0].mxu0
        %v1681 = vadd.f32 0.0, %v1680
        %v1682 = vpop.f32.mrb[0].mxu0
        %v1683 = vadd.f32 0.0, %v1682
        %1684 = vmatprep.mubr.bf16.mxu0 %v1389
        %1685 = vmatmul.mubr.bf16.gmra.mrb[0].mxu0 %v1388
        %v1686 = vpop.f32.mrb[0].mxu0
        %v1687 = vadd.f32 0.0, %v1686
        %v1688 = vpop.f32.mrb[0].mxu0
        %v1689 = vadd.f32 0.0, %v1688
        %v1690 = vpop.f32.mrb[0].mxu0
        %v1691 = vadd.f32 0.0, %v1690
        %v1692 = vpop.f32.mrb[0].mxu0
        %v1693 = vadd.f32 0.0, %v1692
        %1694 = vdwg.mxu0
        %vm1695 = vcmp.le.f32.partialorder %v1617, 16.0
        %vm1696 = vcmp.le.f32.partialorder %v1619, 16.0
        %vm1697 = vcmp.le.f32.partialorder %v1621, 16.0
        %vm1698 = vcmp.le.f32.partialorder %v1623, 16.0
        %vm1699 = vcmp.le.f32.partialorder %v1627, 16.0
        %vm1700 = vcmp.le.f32.partialorder %v1629, 16.0
        %vm1701 = vcmp.le.f32.partialorder %v1631, 16.0
        %vm1702 = vcmp.le.f32.partialorder %v1633, 16.0
        %vm1703 = vcmp.le.f32.partialorder %v1637, 16.0
        %vm1704 = vcmp.le.f32.partialorder %v1639, 16.0
        %vm1705 = vcmp.le.f32.partialorder %v1641, 16.0
        %vm1706 = vcmp.le.f32.partialorder %v1643, 16.0
        %vm1707 = vcmp.le.f32.partialorder %v1647, 16.0
        %vm1708 = vcmp.le.f32.partialorder %v1649, 16.0
        %vm1709 = vcmp.le.f32.partialorder %v1651, 16.0
        %vm1710 = vcmp.le.f32.partialorder %v1653, 16.0
        %vm1711 = vcmp.le.f32.partialorder %v1657, 16.0
        %vm1712 = vcmp.le.f32.partialorder %v1659, 16.0
        %vm1713 = vcmp.le.f32.partialorder %v1661, 16.0
        %vm1714 = vcmp.le.f32.partialorder %v1663, 16.0
        %vm1715 = vcmp.le.f32.partialorder %v1667, 16.0
        %vm1716 = vcmp.le.f32.partialorder %v1669, 16.0
        %vm1717 = vcmp.le.f32.partialorder %v1671, 16.0
        %vm1718 = vcmp.le.f32.partialorder %v1673, 16.0
        %vm1719 = vcmp.le.f32.partialorder %v1677, 16.0
        %vm1720 = vcmp.le.f32.partialorder %v1679, 16.0
        %vm1721 = vcmp.le.f32.partialorder %v1681, 16.0
        %vm1722 = vcmp.le.f32.partialorder %v1683, 16.0
        %vm1723 = vcmp.le.f32.partialorder %v1687, 16.0
        %vm1724 = vcmp.le.f32.partialorder %v1689, 16.0
        %vm1725 = vcmp.le.f32.partialorder %v1691, 16.0
        %vm1726 = vcmp.le.f32.partialorder %v1693, 16.0
        %vm1727 = vmand %vm1278, %vm1695
        %vm1728 = vmand %vm1279, %vm1696
        %vm1729 = vmand %vm1280, %vm1697
        %vm1730 = vmand %vm1281, %vm1698
        %vm1731 = vmand %vm1282, %vm1699
        %vm1732 = vmand %vm1283, %vm1700
        %vm1733 = vmand %vm1284, %vm1701
        %vm1734 = vmand %vm1285, %vm1702
        %vm1735 = vmand %vm1286, %vm1703
        %vm1736 = vmand %vm1287, %vm1704
        %vm1737 = vmand %vm1288, %vm1705
        %vm1738 = vmand %vm1289, %vm1706
        %vm1739 = vmand %vm1290, %vm1707
        %vm1740 = vmand %vm1291, %vm1708
        %vm1741 = vmand %vm1292, %vm1709
        %vm1742 = vmand %vm1293, %vm1710
        %vm1743 = vmand %vm1294, %vm1711
        %vm1744 = vmand %vm1295, %vm1712
        %vm1745 = vmand %vm1296, %vm1713
        %vm1746 = vmand %vm1297, %vm1714
        %vm1747 = vmand %vm1298, %vm1715
        %vm1748 = vmand %vm1299, %vm1716
        %vm1749 = vmand %vm1300, %vm1717
        %vm1750 = vmand %vm1301, %vm1718
        %vm1751 = vmand %vm1302, %vm1719
        %vm1752 = vmand %vm1303, %vm1720
        %vm1753 = vmand %vm1304, %vm1721
        %vm1754 = vmand %vm1305, %vm1722
        %vm1755 = vmand %vm1306, %vm1723
        %vm1756 = vmand %vm1307, %vm1724
        %vm1757 = vmand %vm1308, %vm1725
        %vm1758 = vmand %vm1309, %vm1726
        %vm1759 = vmpackc.low %vm1729, %vm1727
        %vm1760 = vmpackc.low %vm1733, %vm1731
        %vm1761 = vmpackc.even %vm1760, %vm1759
        %vm1762 = vmpackc.low %vm1730, %vm1728
        %vm1763 = vmpackc.low %vm1734, %vm1732
        %vm1764 = vmpackc.even %vm1763, %vm1762
        %vm1765 = vmpackc.low %vm1737, %vm1735
        %vm1766 = vmpackc.low %vm1741, %vm1739
        %vm1767 = vmpackc.even %vm1766, %vm1765
        %vm1768 = vmpackc.low %vm1738, %vm1736
        %vm1769 = vmpackc.low %vm1742, %vm1740
        %vm1770 = vmpackc.even %vm1769, %vm1768
        %vm1771 = vmpackc.low %vm1745, %vm1743
        %vm1772 = vmpackc.low %vm1749, %vm1747
        %vm1773 = vmpackc.even %vm1772, %vm1771
        %vm1774 = vmpackc.low %vm1746, %vm1744
        %vm1775 = vmpackc.low %vm1750, %vm1748
        %vm1776 = vmpackc.even %vm1775, %vm1774
        %vm1777 = vmpackc.low %vm1753, %vm1751
        %vm1778 = vmpackc.low %vm1757, %vm1755
        %vm1779 = vmpackc.even %vm1778, %vm1777
        %vm1780 = vmpackc.low %vm1754, %vm1752
        %vm1781 = vmpackc.low %vm1758, %vm1756
        %vm1782 = vmpackc.even %vm1781, %vm1780
        %v1783 = vsel %vm1761, 16843009, 0
        %v1784 = vsel %vm1764, 16843009, 0
        %v1785 = vsel %vm1767, 16843009, 0
        %v1786 = vsel %vm1770, 16843009, 0
        %v1787 = vsel %vm1773, 16843009, 0
        %v1788 = vsel %vm1776, 16843009, 0
        %v1789 = vsel %vm1779, 16843009, 0
        %v1790 = vsel %vm1782, 16843009, 0
        %1791 = vst [vmem:[%s232] sm:$0xff] %v1783
        %1792 = vst [vmem:[%s232 + $0x8] sm:$0xff] %v1784
        %1793 = vst [vmem:[%s232 + $0x10] sm:$0xff] %v1785
        %1794 = vst [vmem:[%s232 + $0x18] sm:$0xff] %v1786
        %1795 = vst [vmem:[%s232 + $0x20] sm:$0xff] %v1787
        %1796 = vst [vmem:[%s232 + $0x28] sm:$0xff] %v1788
        %1797 = vst [vmem:[%s232 + $0x30] sm:$0xff] %v1789
        %1798 = vst [vmem:[%s232 + $0x38] sm:$0xff] %v1790
        %s1799 = sand.u32 %s131, 1
        %s1800 = scalar_lea.sflag [#allocation3], %s1799
        %s1801 = sand.u32 %s131, 1
        %s1802 = smul.addr %s1801, 64
        %s1803 = scalar_lea.vmem [#allocation2], %s1802
        // Predicated region
        $region37: #{tpu_custom_call.1} parent=35 // pred_check
          %p1804 = pneg %p141
        $region38: #{tpu_custom_call.1} parent=35 // pred_check_branch
          %1806 = sbr.rel (%p1804) target = $region40
        $region39: #{tpu_custom_call.1} parent=35 // pred_region
          %s1807 = smul.u32 4, %s18
          %s1809 = ssub.s32 1024, 1024
          %1810 = vsyncadd %s1800, %s1809
          %s1811 = smul.addr %s1807, 2
          %s1812 = smul.addr %s1811, 128
          %s1813 = scalar_lea.hbm %s4, %s1812
          %s1814 = sshll.u32 %s1803, 4
          %s1815 = int_to_ptr.vmem [resolvable:$true] %s1814
          %1820 = dma.vmem_to_hbm [thread:$0]  %s1815, 1024, %s1813, %s1800, 256, 256, 16
        $region40: #{tpu_custom_call.1} parent=35 // pred_fallthru
          _
      $region36: #{tpu_custom_call.1} parent=5 // pred_fallthru
        _
      %p1821 = scmp.le.s32.totalorder 2, %s13
      // Predicated region
      $region41: #{tpu_custom_call.1} parent=5 // pred_check
        %p1822 = pneg %p1821
      $region42: #{tpu_custom_call.1} parent=5 // pred_check_branch
        %1824 = sbr.rel (%p1822) target = $region44
      $region43: #{tpu_custom_call.1} parent=5 // pred_region
        %s1825 = ssub.s32 %s13, 2
        // Predicated region
        $region45: #{tpu_custom_call.1} parent=43 // pred_check
          %p1826 = pneg %p147
        $region46: #{tpu_custom_call.1} parent=43 // pred_check_branch
          %1828 = sbr.rel (%p1826) target = $region48
        $region47: #{tpu_custom_call.1} parent=43 // pred_region
          %s1829 = sand.u32 %s132, 1
          %s1830 = scalar_lea.sflag [#allocation3], %s1829
          %s1831 = sand.u32 %s132, 1
          %s1832 = smul.addr %s1831, 64
          %s1833 = scalar_lea.vmem [#allocation2], %s1832
          %1834 = dma.done %s1830, 1024
        $region48: #{tpu_custom_call.1} parent=43 // pred_fallthru
          _
      $region44: #{tpu_custom_call.1} parent=5 // pred_fallthru
        _
    $region6: #{tpu_custom_call.1} parent=1 // loop_footer
      %s17 = sadd.s32 1, %s13
    $region7: #{tpu_custom_call.1} parent=1 // loop_footer_branch
      %12 = sbr.rel target = $region3
    $region8: #{tpu_custom_call.1} parent=1 // loop_exit
      _
    %1835 = vsyncpa [#allocation3], 1
    %s1836 = scalar_lea.sflag [#allocation3], 1
    %1837 = vsyncpa %s1836, 1

</llo_original>
